<compile_context>
chip_gen: v7x
topology: tpu7x:2x2x1
jax: 0.10.0
libtpu: 0.0.40
codegen_flags: <defaults>
</compile_context>

<pallas_src>
import jax
import jax.numpy as jnp
from jax.experimental import pallas as pl
from jax.experimental.pallas import tpu as pltpu


def _round_up(x, m):
    return ((x + m - 1) // m) * m


def _batch_net5_kernel(x_ref,
                       w1_ref, t1_ref,
                       w2_ref, t2_ref,
                       w3_ref, t3_ref,
                       w4_ref, t4_ref,
                       w5_ref, t5_ref,
                       w6_ref, b6_ref,
                       o_ref):
    """One batch tile of the whole 6-layer MLP. All intermediates stay in vregs."""

    def fused_layer(h, w_ref, t_ref):
        # Linear with BN scale pre-folded into the (bf16) weights, f32 accumulation,
        # then shift (= folded bias/mean/beta) + ReLU in f32, pack back to bf16.
        z = jnp.dot(h, w_ref[...], preferred_element_type=jnp.float32)
        z = z + t_ref[...]
        return jnp.maximum(z, 0.0).astype(jnp.bfloat16)

    # x arrives in f32 straight from HBM; cast to bf16 on the VPU here instead of
    # paying a separate wrapper-side cast pass over HBM.
    h = x_ref[...].astype(jnp.bfloat16)              # [TB, in_dim] bf16
    h = fused_layer(h, w1_ref, t1_ref)
    h = fused_layer(h, w2_ref, t2_ref)
    h = fused_layer(h, w3_ref, t3_ref)
    h = fused_layer(h, w4_ref, t4_ref)
    h = fused_layer(h, w5_ref, t5_ref)
    # Final Linear (no BN / ReLU). Output features are zero-padded to a multiple of
    # 128 by the wrapper, so this store is lane-dense (unmasked vst), and bf16 so
    # the writeback traffic is halved.
    z = jnp.dot(h, w6_ref[...], preferred_element_type=jnp.float32) + b6_ref[...]
    o_ref[...] = z.astype(o_ref.dtype)


def batch_net5_forward(x, params, *, block_batch=512, eps=1e-5):
    """Forward pass of Batch_Net_5 (eval mode) as a single Pallas kernel.

    Args:
      x: [B, in_dim] float array.
      params: (layers, final) where
        layers = list of 5 tuples (w [in, out], b [out], gamma, beta, running_mean,
                                   running_var) for Linear + BatchNorm1d + ReLU
        final  = (w [h5, out_dim], b [out_dim]) for the last Linear.
    Returns:
      [B, out_dim] float32.
    """
    layers, (w_out, b_out) = params
    B, in_dim = x.shape
    out_dim = w_out.shape[1]

    # ---- Fold eval-mode BatchNorm1d into the weights (host side) ----
    #   y = gamma * (x@W + b - mean) / sqrt(var + eps) + beta
    #     = x @ (W * s) + t,   s = gamma / sqrt(var + eps),  t = (b - mean) * s + beta
    # Hidden widths are zero-padded to multiples of 128 (zero cols, zero rows in the
    # next layer, zero shifts) so every activation vreg / MXU tile is full. Exact.
    kernel_args = []
    prev_pad = in_dim            # x columns are not padded (full-dim block)
    for (w, b, gamma, beta, mean, var) in layers:
        fan_out = w.shape[1]
        out_p = _round_up(fan_out, 128)
        s = gamma / jnp.sqrt(var + eps)
        t = (b - mean) * s + beta
        w_folded = w * s[None, :]                                  # fold BN scale
        w_pad = jnp.zeros((prev_pad, out_p), jnp.float32)
        w_pad = w_pad.at[:w.shape[0], :fan_out].set(w_folded)
        t_pad = jnp.zeros((1, out_p), jnp.float32).at[:, :fan_out].set(t.reshape(1, -1))
        kernel_args += [w_pad.astype(jnp.bfloat16), t_pad]
        prev_pad = out_p

    # Final layer: lane-dense output (features padded to a multiple of 128).
    out_pad = _round_up(out_dim, 128)
    w6 = jnp.zeros((prev_pad, out_pad), jnp.float32)
    w6 = w6.at[:w_out.shape[0], :out_dim].set(w_out)
    b6 = jnp.zeros((1, out_pad), jnp.float32).at[:, :out_dim].set(b_out.reshape(1, -1))
    kernel_args += [w6.astype(jnp.bfloat16), b6]

    # ---- Batch tiling: multiples of 16 rows (bf16 sublane pack), >=2 tiles when
    # the batch is large enough so both v7x TensorCores get work. ----
    tb = _round_up(max(16, min(block_batch, B)), 16)
    half = _round_up(-(-B // 2), 16)
    if tb > half and half >= 128:
        tb = half                                     # even 2-way split for megacore
    b_pad = _round_up(B, tb)
    x_in = x.astype(jnp.float32)
    if b_pad != B:
        x_in = jnp.zeros((b_pad, in_dim), jnp.float32).at[:B].set(x_in)
    grid = (b_pad // tb,)

    def resident(a):
        # Full-array block, constant index_map -> weights stay VMEM-resident across
        # every batch tile (DMA'd from HBM exactly once).
        return pl.BlockSpec(a.shape, lambda i: (0, 0))

    in_specs = [pl.BlockSpec((tb, in_dim), lambda i: (i, 0))] + [
        resident(a) for a in kernel_args
    ]
    out_specs = pl.BlockSpec((tb, out_pad), lambda i: (i, 0))

    # ---- VMEM budget guard (v7x: 64 MiB physical, 32 MiB scoped default) ----
    resident_bytes = sum(int(a.size) * a.dtype.itemsize for a in kernel_args)
    tile_bytes = 2 * (tb * in_dim * 4 + tb * out_pad * 2)   # double-buffered x/out tiles
    vmem_limit = int(min(max(resident_bytes + 2 * tile_bytes + (8 << 20), 32 << 20),
                         100 << 20))

    # Advisory cost estimate for XLA's scheduler.
    dims = [in_dim] + [a.shape[1] for a in kernel_args[0::2]]
    flops = 2 * b_pad * sum(dims[i] * dims[i + 1] for i in range(len(dims) - 1))
    bytes_accessed = int(x_in.size * 4 + b_pad * out_pad * 2 + resident_bytes)
    cost = pl.CostEstimate(flops=flops, transcendentals=0, bytes_accessed=bytes_accessed)

    out = pl.pallas_call(
        _batch_net5_kernel,
        out_shape=jax.ShapeDtypeStruct((b_pad, out_pad), jnp.bfloat16),
        grid=grid,
        in_specs=in_specs,
        out_specs=out_specs,
        compiler_params=pltpu.CompilerParams(
            dimension_semantics=("parallel",),   # v7x: shard batch tiles over both TCs
            vmem_limit_bytes=vmem_limit,
        ),
        cost_estimate=cost,
    )(x_in, *kernel_args)

    return out[:B, :out_dim].astype(jnp.float32)


# ----------------------------- parameter init ---------------------------------
def init_params(key, in_dim, hidden_dims, out_dim):
    """Deterministic params mimicking nn.Linear U(-1/sqrt(fan_in), +) init, with
    non-trivial BatchNorm running statistics so the BN path is exercised."""
    dims = [in_dim] + list(hidden_dims)
    n_bn = len(hidden_dims)
    keys = jax.random.split(key, 6 * n_bn + 2)
    layers = []
    k = 0
    for li in range(n_bn):
        fan_in, fan_out = dims[li], dims[li + 1]
        bound = 1.0 / jnp.sqrt(fan_in)
        w = jax.random.uniform(keys[k], (fan_in, fan_out), jnp.float32, -bound, bound); k += 1
        b = jax.random.uniform(keys[k], (fan_out,), jnp.float32, -bound, bound); k += 1
        gamma = jax.random.uniform(keys[k], (fan_out,), jnp.float32, 0.5, 1.5); k += 1
        beta = jax.random.uniform(keys[k], (fan_out,), jnp.float32, -0.5, 0.5); k += 1
        mean = 0.1 * jax.random.normal(keys[k], (fan_out,), jnp.float32); k += 1
        var = jax.random.uniform(keys[k], (fan_out,), jnp.float32, 0.5, 2.0); k += 1
        layers.append((w, b, gamma, beta, mean, var))
    bound = 1.0 / jnp.sqrt(hidden_dims[-1])
    w = jax.random.uniform(keys[k], (hidden_dims[-1], out_dim), jnp.float32, -bound, bound); k += 1
    b = jax.random.uniform(keys[k], (out_dim,), jnp.float32, -bound, bound)
    return layers, (w, b)


# ------------------------------- references -----------------------------------
def reference_forward_bf16(x, params, eps=1e-5):
    """Pure-JAX mirror of the exact kernel math: BN scale folded into the weights
    before the bf16 cast, f32 accumulation, bf16 activations, bf16 final output."""
    layers, (w_out, b_out) = params
    h = x.astype(jnp.bfloat16)
    for (w, b, gamma, beta, mean, var) in layers:
        s = gamma / jnp.sqrt(var + eps)
        t = (b - mean) * s + beta
        wf = (w * s[None, :]).astype(jnp.bfloat16)
        z = jnp.dot(h, wf, preferred_element_type=jnp.float32) + t
        h = jnp.maximum(z, 0.0).astype(jnp.bfloat16)
    z = jnp.dot(h, w_out.astype(jnp.bfloat16), preferred_element_type=jnp.float32) + b_out
    return z.astype(jnp.bfloat16).astype(jnp.float32)


def reference_forward_f32(x, params, eps=1e-5):
    """Full-f32 eval-mode reference (PyTorch semantics)."""
    layers, (w_out, b_out) = params
    h = x.astype(jnp.float32)
    for (w, b, gamma, beta, mean, var) in layers:
        z = h @ w + b
        z = (z - mean) / jnp.sqrt(var + eps) * gamma + beta
        h = jnp.maximum(z, 0.0)
    return h @ w_out + b_out


if __name__ == "__main__":
    # Batch_Net_5(in_dim, n_hidden_1..5, out_dim) at small shapes.
    in_dim, h1, h2, h3, h4, h5, out_dim = 64, 128, 128, 96, 96, 64, 10
    batch = 256  # exercises the batch grid: 2 parallel tiles of 128 rows

    key = jax.random.PRNGKey(0)
    kx, kp = jax.random.split(key)
    x = jax.random.normal(kx, (batch, in_dim), dtype=jnp.float32)
    params = init_params(kp, in_dim, (h1, h2, h3, h4, h5), out_dim)

    out = batch_net5_forward(x, params)
    out = jax.block_until_ready(out)
    assert out.shape == (batch, out_dim)

    # Tight check against a pure-JAX mirror of the exact kernel math.
    ref_bf16 = reference_forward_bf16(x, params)
    assert jnp.allclose(out, ref_bf16, atol=1e-3, rtol=1e-3), float(
        jnp.max(jnp.abs(out - ref_bf16))
    )

    # Loose check against full-f32 PyTorch eval-mode semantics (bf16 weight
    # rounding over 6 layers gives ~1e-2 scale differences).
    ref_f32 = reference_forward_f32(x, params)
    assert jnp.allclose(out, ref_f32, atol=1e-1, rtol=1e-1), float(
        jnp.max(jnp.abs(out - ref_f32))
    )

    print("KERNEL_OK")
</pallas_src>

<mosaic_0001>
module attributes {stable_mosaic.version = 11 : i64} {
  func.func @_batch_net5_kernel(%arg0: i32, %arg1: memref<128x64xf32, #tpu.memory_space<vmem>>, %arg2: memref<64x128xbf16, #tpu.memory_space<vmem>>, %arg3: memref<1x128xf32, #tpu.memory_space<vmem>>, %arg4: memref<128x128xbf16, #tpu.memory_space<vmem>>, %arg5: memref<1x128xf32, #tpu.memory_space<vmem>>, %arg6: memref<128x128xbf16, #tpu.memory_space<vmem>>, %arg7: memref<1x128xf32, #tpu.memory_space<vmem>>, %arg8: memref<128x128xbf16, #tpu.memory_space<vmem>>, %arg9: memref<1x128xf32, #tpu.memory_space<vmem>>, %arg10: memref<128x128xbf16, #tpu.memory_space<vmem>>, %arg11: memref<1x128xf32, #tpu.memory_space<vmem>>, %arg12: memref<128x128xbf16, #tpu.memory_space<vmem>>, %arg13: memref<1x128xf32, #tpu.memory_space<vmem>>, %arg14: memref<128x128xbf16, #tpu.memory_space<vmem>>) attributes {dimension_semantics = [#tpu.dimension_semantics<parallel>], iteration_bounds = array<i64: 2>, scalar_prefetch = 0 : i64, scratch_operands = 0 : i64, tpu.core_type = #tpu.core_type<tc>, window_params = [{transform_indices = @transform_0, window_bounds = array<i64: 128, 64>}, {pipeline_mode = #tpu.pipeline_mode<synchronous>, transform_indices = @transform_1, window_bounds = array<i64: 64, 128>}, {pipeline_mode = #tpu.pipeline_mode<synchronous>, transform_indices = @transform_2, window_bounds = array<i64: 1, 128>}, {pipeline_mode = #tpu.pipeline_mode<synchronous>, transform_indices = @transform_3, window_bounds = array<i64: 128, 128>}, {pipeline_mode = #tpu.pipeline_mode<synchronous>, transform_indices = @transform_4, window_bounds = array<i64: 1, 128>}, {pipeline_mode = #tpu.pipeline_mode<synchronous>, transform_indices = @transform_5, window_bounds = array<i64: 128, 128>}, {pipeline_mode = #tpu.pipeline_mode<synchronous>, transform_indices = @transform_6, window_bounds = array<i64: 1, 128>}, {pipeline_mode = #tpu.pipeline_mode<synchronous>, transform_indices = @transform_7, window_bounds = array<i64: 128, 128>}, {pipeline_mode = #tpu.pipeline_mode<synchronous>, transform_indices = @transform_8, window_bounds = array<i64: 1, 128>}, {pipeline_mode = #tpu.pipeline_mode<synchronous>, transform_indices = @transform_9, window_bounds = array<i64: 128, 128>}, {pipeline_mode = #tpu.pipeline_mode<synchronous>, transform_indices = @transform_10, window_bounds = array<i64: 1, 128>}, {pipeline_mode = #tpu.pipeline_mode<synchronous>, transform_indices = @transform_11, window_bounds = array<i64: 128, 128>}, {pipeline_mode = #tpu.pipeline_mode<synchronous>, transform_indices = @transform_12, window_bounds = array<i64: 1, 128>}, {transform_indices = @transform_13, window_bounds = array<i64: 128, 128>}]} {
    %c0 = arith.constant 0 : index
    %c0_0 = arith.constant 0 : index
    %0 = vector.load %arg1[%c0, %c0_0] : memref<128x64xf32, #tpu.memory_space<vmem>>, vector<128x64xf32>
    %1 = arith.truncf %0 : vector<128x64xf32> to vector<128x64xbf16>
    %c0_1 = arith.constant 0 : index
    %c0_2 = arith.constant 0 : index
    %2 = vector.load %arg2[%c0_1, %c0_2] : memref<64x128xbf16, #tpu.memory_space<vmem>>, vector<64x128xbf16>
    %cst = arith.constant dense<0.000000e+00> : vector<128x128xf32>
    %3 = tpu.matmul %1, %2, %cst {dimension_numbers = #tpu.dot_dimension_numbers<[1], [0], [0], [1], [0, 0, 1, 1], [], []>} : vector<128x64xbf16>, vector<64x128xbf16>, vector<128x128xf32> -> vector<128x128xf32>
    %c0_3 = arith.constant 0 : index
    %c0_4 = arith.constant 0 : index
    %4 = vector.load %arg3[%c0_3, %c0_4] : memref<1x128xf32, #tpu.memory_space<vmem>>, vector<1x128xf32>
    %5 = vector.broadcast %4 : vector<1x128xf32> to vector<128x128xf32>
    %6 = arith.addf %3, %5 : vector<128x128xf32>
    %cst_5 = arith.constant 0.000000e+00 : f32
    %7 = vector.broadcast %cst_5 : f32 to vector<128x128xf32>
    %8 = arith.maximumf %6, %7 : vector<128x128xf32>
    %9 = arith.truncf %8 : vector<128x128xf32> to vector<128x128xbf16>
    %c0_6 = arith.constant 0 : index
    %c0_7 = arith.constant 0 : index
    %10 = vector.load %arg4[%c0_6, %c0_7] : memref<128x128xbf16, #tpu.memory_space<vmem>>, vector<128x128xbf16>
    %cst_8 = arith.constant dense<0.000000e+00> : vector<128x128xf32>
    %11 = tpu.matmul %9, %10, %cst_8 {dimension_numbers = #tpu.dot_dimension_numbers<[1], [0], [0], [1], [0, 0, 1, 1], [], []>} : vector<128x128xbf16>, vector<128x128xbf16>, vector<128x128xf32> -> vector<128x128xf32>
    %c0_9 = arith.constant 0 : index
    %c0_10 = arith.constant 0 : index
    %12 = vector.load %arg5[%c0_9, %c0_10] : memref<1x128xf32, #tpu.memory_space<vmem>>, vector<1x128xf32>
    %13 = vector.broadcast %12 : vector<1x128xf32> to vector<128x128xf32>
    %14 = arith.addf %11, %13 : vector<128x128xf32>
    %cst_11 = arith.constant 0.000000e+00 : f32
    %15 = vector.broadcast %cst_11 : f32 to vector<128x128xf32>
    %16 = arith.maximumf %14, %15 : vector<128x128xf32>
    %17 = arith.truncf %16 : vector<128x128xf32> to vector<128x128xbf16>
    %c0_12 = arith.constant 0 : index
    %c0_13 = arith.constant 0 : index
    %18 = vector.load %arg6[%c0_12, %c0_13] : memref<128x128xbf16, #tpu.memory_space<vmem>>, vector<128x128xbf16>
    %cst_14 = arith.constant dense<0.000000e+00> : vector<128x128xf32>
    %19 = tpu.matmul %17, %18, %cst_14 {dimension_numbers = #tpu.dot_dimension_numbers<[1], [0], [0], [1], [0, 0, 1, 1], [], []>} : vector<128x128xbf16>, vector<128x128xbf16>, vector<128x128xf32> -> vector<128x128xf32>
    %c0_15 = arith.constant 0 : index
    %c0_16 = arith.constant 0 : index
    %20 = vector.load %arg7[%c0_15, %c0_16] : memref<1x128xf32, #tpu.memory_space<vmem>>, vector<1x128xf32>
    %21 = vector.broadcast %20 : vector<1x128xf32> to vector<128x128xf32>
    %22 = arith.addf %19, %21 : vector<128x128xf32>
    %cst_17 = arith.constant 0.000000e+00 : f32
    %23 = vector.broadcast %cst_17 : f32 to vector<128x128xf32>
    %24 = arith.maximumf %22, %23 : vector<128x128xf32>
    %25 = arith.truncf %24 : vector<128x128xf32> to vector<128x128xbf16>
    %c0_18 = arith.constant 0 : index
    %c0_19 = arith.constant 0 : index
    %26 = vector.load %arg8[%c0_18, %c0_19] : memref<128x128xbf16, #tpu.memory_space<vmem>>, vector<128x128xbf16>
    %cst_20 = arith.constant dense<0.000000e+00> : vector<128x128xf32>
    %27 = tpu.matmul %25, %26, %cst_20 {dimension_numbers = #tpu.dot_dimension_numbers<[1], [0], [0], [1], [0, 0, 1, 1], [], []>} : vector<128x128xbf16>, vector<128x128xbf16>, vector<128x128xf32> -> vector<128x128xf32>
    %c0_21 = arith.constant 0 : index
    %c0_22 = arith.constant 0 : index
    %28 = vector.load %arg9[%c0_21, %c0_22] : memref<1x128xf32, #tpu.memory_space<vmem>>, vector<1x128xf32>
    %29 = vector.broadcast %28 : vector<1x128xf32> to vector<128x128xf32>
    %30 = arith.addf %27, %29 : vector<128x128xf32>
    %cst_23 = arith.constant 0.000000e+00 : f32
    %31 = vector.broadcast %cst_23 : f32 to vector<128x128xf32>
    %32 = arith.maximumf %30, %31 : vector<128x128xf32>
    %33 = arith.truncf %32 : vector<128x128xf32> to vector<128x128xbf16>
    %c0_24 = arith.constant 0 : index
    %c0_25 = arith.constant 0 : index
    %34 = vector.load %arg10[%c0_24, %c0_25] : memref<128x128xbf16, #tpu.memory_space<vmem>>, vector<128x128xbf16>
    %cst_26 = arith.constant dense<0.000000e+00> : vector<128x128xf32>
    %35 = tpu.matmul %33, %34, %cst_26 {dimension_numbers = #tpu.dot_dimension_numbers<[1], [0], [0], [1], [0, 0, 1, 1], [], []>} : vector<128x128xbf16>, vector<128x128xbf16>, vector<128x128xf32> -> vector<128x128xf32>
    %c0_27 = arith.constant 0 : index
    %c0_28 = arith.constant 0 : index
    %36 = vector.load %arg11[%c0_27, %c0_28] : memref<1x128xf32, #tpu.memory_space<vmem>>, vector<1x128xf32>
    %37 = vector.broadcast %36 : vector<1x128xf32> to vector<128x128xf32>
    %38 = arith.addf %35, %37 : vector<128x128xf32>
    %cst_29 = arith.constant 0.000000e+00 : f32
    %39 = vector.broadcast %cst_29 : f32 to vector<128x128xf32>
    %40 = arith.maximumf %38, %39 : vector<128x128xf32>
    %41 = arith.truncf %40 : vector<128x128xf32> to vector<128x128xbf16>
    %c0_30 = arith.constant 0 : index
    %c0_31 = arith.constant 0 : index
    %42 = vector.load %arg12[%c0_30, %c0_31] : memref<128x128xbf16, #tpu.memory_space<vmem>>, vector<128x128xbf16>
    %cst_32 = arith.constant dense<0.000000e+00> : vector<128x128xf32>
    %43 = tpu.matmul %41, %42, %cst_32 {dimension_numbers = #tpu.dot_dimension_numbers<[1], [0], [0], [1], [0, 0, 1, 1], [], []>} : vector<128x128xbf16>, vector<128x128xbf16>, vector<128x128xf32> -> vector<128x128xf32>
    %c0_33 = arith.constant 0 : index
    %c0_34 = arith.constant 0 : index
    %44 = vector.load %arg13[%c0_33, %c0_34] : memref<1x128xf32, #tpu.memory_space<vmem>>, vector<1x128xf32>
    %45 = vector.broadcast %44 : vector<1x128xf32> to vector<128x128xf32>
    %46 = arith.addf %43, %45 : vector<128x128xf32>
    %47 = arith.truncf %46 : vector<128x128xf32> to vector<128x128xbf16>
    %c0_35 = arith.constant 0 : index
    %c0_36 = arith.constant 0 : index
    %48 = vector.load %arg14[%c0_35, %c0_36] : memref<128x128xbf16, #tpu.memory_space<vmem>>, vector<128x128xbf16>
    tpu.vector_store %arg14[%c0_35, %c0_36], %47 {strides = array<i32>} : memref<128x128xbf16, #tpu.memory_space<vmem>>, vector<128x128xbf16>,
    return
  }
  func.func @transform_0(%arg0: i32) -> (i32, i32) {
    %c0_i32 = arith.constant 0 : i32
    %c0_i32_0 = arith.constant 0 : i32
    return %arg0, %c0_i32 : i32, i32
  }
  func.func @transform_1(%arg0: i32) -> (i32, i32) {
    %c0_i32 = arith.constant 0 : i32
    %c0_i32_0 = arith.constant 0 : i32
    %c0_i32_1 = arith.constant 0 : i32
    return %c0_i32, %c0_i32_0 : i32, i32
  }
  func.func @transform_2(%arg0: i32) -> (i32, i32) {
    %c0_i32 = arith.constant 0 : i32
    %c0_i32_0 = arith.constant 0 : i32
    %c0_i32_1 = arith.constant 0 : i32
    return %c0_i32, %c0_i32_0 : i32, i32
  }
  func.func @transform_3(%arg0: i32) -> (i32, i32) {
    %c0_i32 = arith.constant 0 : i32
    %c0_i32_0 = arith.constant 0 : i32
    %c0_i32_1 = arith.constant 0 : i32
    return %c0_i32, %c0_i32_0 : i32, i32
  }
  func.func @transform_4(%arg0: i32) -> (i32, i32) {
    %c0_i32 = arith.constant 0 : i32
    %c0_i32_0 = arith.constant 0 : i32
    %c0_i32_1 = arith.constant 0 : i32
    return %c0_i32, %c0_i32_0 : i32, i32
  }
  func.func @transform_5(%arg0: i32) -> (i32, i32) {
    %c0_i32 = arith.constant 0 : i32
    %c0_i32_0 = arith.constant 0 : i32
    %c0_i32_1 = arith.constant 0 : i32
    return %c0_i32, %c0_i32_0 : i32, i32
  }
  func.func @transform_6(%arg0: i32) -> (i32, i32) {
    %c0_i32 = arith.constant 0 : i32
    %c0_i32_0 = arith.constant 0 : i32
    %c0_i32_1 = arith.constant 0 : i32
    return %c0_i32, %c0_i32_0 : i32, i32
  }
  func.func @transform_7(%arg0: i32) -> (i32, i32) {
    %c0_i32 = arith.constant 0 : i32
    %c0_i32_0 = arith.constant 0 : i32
    %c0_i32_1 = arith.constant 0 : i32
    return %c0_i32, %c0_i32_0 : i32, i32
  }
  func.func @transform_8(%arg0: i32) -> (i32, i32) {
    %c0_i32 = arith.constant 0 : i32
    %c0_i32_0 = arith.constant 0 : i32
    %c0_i32_1 = arith.constant 0 : i32
    return %c0_i32, %c0_i32_0 : i32, i32
  }
  func.func @transform_9(%arg0: i32) -> (i32, i32) {
    %c0_i32 = arith.constant 0 : i32
    %c0_i32_0 = arith.constant 0 : i32
    %c0_i32_1 = arith.constant 0 : i32
    return %c0_i32, %c0_i32_0 : i32, i32
  }
  func.func @transform_10(%arg0: i32) -> (i32, i32) {
    %c0_i32 = arith.constant 0 : i32
    %c0_i32_0 = arith.constant 0 : i32
    %c0_i32_1 = arith.constant 0 : i32
    return %c0_i32, %c0_i32_0 : i32, i32
  }
  func.func @transform_11(%arg0: i32) -> (i32, i32) {
    %c0_i32 = arith.constant 0 : i32
    %c0_i32_0 = arith.constant 0 : i32
    %c0_i32_1 = arith.constant 0 : i32
    return %c0_i32, %c0_i32_0 : i32, i32
  }
  func.func @transform_12(%arg0: i32) -> (i32, i32) {
    %c0_i32 = arith.constant 0 : i32
    %c0_i32_0 = arith.constant 0 : i32
    %c0_i32_1 = arith.constant 0 : i32
    return %c0_i32, %c0_i32_0 : i32, i32
  }
  func.func @transform_13(%arg0: i32) -> (i32, i32) {
    %c0_i32 = arith.constant 0 : i32
    %c0_i32_0 = arith.constant 0 : i32
    return %arg0, %c0_i32 : i32, i32
  }
}

</mosaic_0001>

<llo_original>
// kernel: tpu_custom_call.1
$region0: #{tpu_custom_call.1}
  #allocation0 [shape = 'u32[]', space=smem, size = 0x4, offset = 0x4, fixed_abs, tag = 'smem constant byte address 0x4 - core index']
  #allocation1 [shape = 'u32[144,128]{1,0:T(1,128)}', space=vmem, size = 0x12000, scoped, tag = 'internal scratch']
  %s0 = inlined_call_operand.vmem [shape: f32[256,64], index: 0, kind: input, shape index: {}]
  %s1 = inlined_call_operand.vmem [shape: bf16[64,128], index: 1, kind: input, shape index: {}]
  %s2 = inlined_call_operand.vmem [shape: f32[1,128], index: 2, kind: input, shape index: {}]
  %s3 = inlined_call_operand.vmem [shape: bf16[128,128], index: 3, kind: input, shape index: {}]
  %s4 = inlined_call_operand.vmem [shape: f32[1,128], index: 4, kind: input, shape index: {}]
  %s5 = inlined_call_operand.vmem [shape: bf16[128,128], index: 5, kind: input, shape index: {}]
  %s6 = inlined_call_operand.vmem [shape: f32[1,128], index: 6, kind: input, shape index: {}]
  %s7 = inlined_call_operand.vmem [shape: bf16[128,128], index: 7, kind: input, shape index: {}]
  %s8 = inlined_call_operand.vmem [shape: f32[1,128], index: 8, kind: input, shape index: {}]
  %s9 = inlined_call_operand.vmem [shape: bf16[128,128], index: 9, kind: input, shape index: {}]
  %s10 = inlined_call_operand.vmem [shape: f32[1,128], index: 10, kind: input, shape index: {}]
  %s11 = inlined_call_operand.vmem [shape: bf16[128,128], index: 11, kind: input, shape index: {}]
  %s12 = inlined_call_operand.vmem [shape: f32[1,128], index: 12, kind: input, shape index: {}]
  %s13 = inlined_call_operand.hbm [shape: bf16[256,128], index: 13, kind: output, shape index: {}]
  %s14 = sld [smem:[#allocation0]]
  $region85: #{tpu_custom_call.1} parent=0
    _
  %s16 = ssub.s32 1, %s14
  %s17 = scalar_select 0, %s16, %s14
  $region1: #{tpu_custom_call.1} parent=0
    #allocation2 [shape = 'u8[65536]{0}', space=vmem, size = 0x10000, scoped, tag = 'output window, operand 0']
    #allocation3 [shape = 's32[2]{0}', space=sflag, size = 0x8, scoped, tag = 'scoped memory for tpu_custom_call.1']
    %18 = vsyncpa [#allocation3], 0
    %s19 = scalar_lea.sflag [#allocation3], 1
    %20 = vsyncpa %s19, 0
    loop: start=0, step=1, limit=4
    $region2: #{tpu_custom_call.1} parent=1 // loop_pre_header
      _
    $region3: #{tpu_custom_call.1} parent=1 // loop_header
      %s22 = sphi 0, %s26
      %p23 = scmp.ge.s32.totalorder %s22, 4
      %s32 = sphi 0, %s34
      %s35 = sphi 0, %s32
      %s36 = sphi 0, %s35
      %s52 = sphi 0, %s36
      %s56 = sphi 0, %s56
      %s58 = sphi 0, %s56
      %s59 = sphi 0, %s58
      %s73 = sphi 0, %s59
      %s77 = sphi 0, %s77
      %s79 = sphi 0, %s77
      %s80 = sphi 0, %s79
      %s94 = sphi 0, %s80
      %s98 = sphi 0, %s98
      %s100 = sphi 0, %s98
      %s101 = sphi 0, %s100
      %s115 = sphi 0, %s101
      %s119 = sphi 0, %s119
      %s121 = sphi 0, %s119
      %s122 = sphi 0, %s121
      %s136 = sphi 0, %s122
      %s140 = sphi 0, %s140
      %s142 = sphi 0, %s140
      %s143 = sphi 0, %s142
      %s157 = sphi 0, %s143
      %s161 = sphi 0, %s161
      %s163 = sphi 0, %s161
      %s164 = sphi 0, %s163
      %s178 = sphi 0, %s164
      %s182 = sphi 0, %s182
      %s184 = sphi 0, %s182
      %s185 = sphi 0, %s184
      %s199 = sphi 0, %s185
      %s203 = sphi 0, %s203
      %s205 = sphi 0, %s203
      %s206 = sphi 0, %s205
      %s220 = sphi 0, %s206
      %s224 = sphi 0, %s224
      %s226 = sphi 0, %s224
      %s227 = sphi 0, %s226
      %s241 = sphi 0, %s227
      %s245 = sphi 0, %s245
      %s247 = sphi 0, %s245
      %s248 = sphi 0, %s247
      %s262 = sphi 0, %s248
      %s266 = sphi 0, %s266
      %s268 = sphi 0, %s266
      %s269 = sphi 0, %s268
      %s283 = sphi 0, %s269
      %s287 = sphi 0, %s287
      %s289 = sphi 0, %s287
      %s290 = sphi 0, %s289
      %s304 = sphi 0, %s290
      %s310 = sphi 0, %s312
      %s313 = sphi 0, %s310
      %s314 = sphi 0, %s313
      %s330 = sphi 0, %s314
    $region4: #{tpu_custom_call.1} parent=1 // loop_header_branch
      %25 = sbr.rel (%p23) target = $region8
    $region5: #{tpu_custom_call.1} parent=1 // loop_body
      %s27 = ssub.s32 %s22, 1
      %s28 = ssub.s32 %s22, 2
      %s29 = sadd.s32 %s22, 1
      %s30 = ssub.s32 %s22, %s29
      %p31 = scmp.eq.s32.totalorder %s30, 0
      %s33 = sadd.s32 %s32, 1
      %s34 = scalar_select %p31, %s32, %s33
      %p37 = pneg %p31
      %p38 = scmp.eq.s32.totalorder %s22, 1
      %p39 = por %p37, %p38
      %p40 = scmp.ne.s32.totalorder %s32, %s35
      %p41 = scmp.eq.s32.totalorder %s22, 0
      %p42 = por %p40, %p41
      %p43 = scmp.ne.s32.totalorder %s32, %s35
      %p44 = scmp.eq.s32.totalorder %s27, 1
      %p45 = por %p43, %p44
      %p46 = scmp.ne.s32.totalorder %s35, %s36
      %p47 = scmp.eq.s32.totalorder %s27, 0
      %p48 = por %p46, %p47
      %p49 = scmp.ne.s32.totalorder %s35, %s36
      %p50 = scmp.eq.s32.totalorder %s28, 1
      %p51 = por %p49, %p50
      %p53 = scmp.ne.s32.totalorder %s36, %s52
      %p54 = scmp.eq.s32.totalorder %s28, 0
      %p55 = por %p53, %p54
      %s57 = sadd.s32 %s56, 1
      %p60 = scmp.eq.s32.totalorder %s22, 1
      %p61 = scmp.ne.s32.totalorder %s56, %s58
      %p62 = scmp.eq.s32.totalorder %s22, 0
      %p63 = por %p61, %p62
      %p64 = scmp.ne.s32.totalorder %s56, %s58
      %p65 = scmp.eq.s32.totalorder %s27, 1
      %p66 = por %p64, %p65
      %p67 = scmp.ne.s32.totalorder %s58, %s59
      %p68 = scmp.eq.s32.totalorder %s27, 0
      %p69 = por %p67, %p68
      %p70 = scmp.ne.s32.totalorder %s58, %s59
      %p71 = scmp.eq.s32.totalorder %s28, 1
      %p72 = por %p70, %p71
      %p74 = scmp.ne.s32.totalorder %s59, %s73
      %p75 = scmp.eq.s32.totalorder %s28, 0
      %p76 = por %p74, %p75
      %s78 = sadd.s32 %s77, 1
      %p81 = scmp.eq.s32.totalorder %s22, 1
      %p82 = scmp.ne.s32.totalorder %s77, %s79
      %p83 = scmp.eq.s32.totalorder %s22, 0
      %p84 = por %p82, %p83
      %p85 = scmp.ne.s32.totalorder %s77, %s79
      %p86 = scmp.eq.s32.totalorder %s27, 1
      %p87 = por %p85, %p86
      %p88 = scmp.ne.s32.totalorder %s79, %s80
      %p89 = scmp.eq.s32.totalorder %s27, 0
      %p90 = por %p88, %p89
      %p91 = scmp.ne.s32.totalorder %s79, %s80
      %p92 = scmp.eq.s32.totalorder %s28, 1
      %p93 = por %p91, %p92
      %p95 = scmp.ne.s32.totalorder %s80, %s94
      %p96 = scmp.eq.s32.totalorder %s28, 0
      %p97 = por %p95, %p96
      %s99 = sadd.s32 %s98, 1
      %p102 = scmp.eq.s32.totalorder %s22, 1
      %p103 = scmp.ne.s32.totalorder %s98, %s100
      %p104 = scmp.eq.s32.totalorder %s22, 0
      %p105 = por %p103, %p104
      %p106 = scmp.ne.s32.totalorder %s98, %s100
      %p107 = scmp.eq.s32.totalorder %s27, 1
      %p108 = por %p106, %p107
      %p109 = scmp.ne.s32.totalorder %s100, %s101
      %p110 = scmp.eq.s32.totalorder %s27, 0
      %p111 = por %p109, %p110
      %p112 = scmp.ne.s32.totalorder %s100, %s101
      %p113 = scmp.eq.s32.totalorder %s28, 1
      %p114 = por %p112, %p113
      %p116 = scmp.ne.s32.totalorder %s101, %s115
      %p117 = scmp.eq.s32.totalorder %s28, 0
      %p118 = por %p116, %p117
      %s120 = sadd.s32 %s119, 1
      %p123 = scmp.eq.s32.totalorder %s22, 1
      %p124 = scmp.ne.s32.totalorder %s119, %s121
      %p125 = scmp.eq.s32.totalorder %s22, 0
      %p126 = por %p124, %p125
      %p127 = scmp.ne.s32.totalorder %s119, %s121
      %p128 = scmp.eq.s32.totalorder %s27, 1
      %p129 = por %p127, %p128
      %p130 = scmp.ne.s32.totalorder %s121, %s122
      %p131 = scmp.eq.s32.totalorder %s27, 0
      %p132 = por %p130, %p131
      %p133 = scmp.ne.s32.totalorder %s121, %s122
      %p134 = scmp.eq.s32.totalorder %s28, 1
      %p135 = por %p133, %p134
      %p137 = scmp.ne.s32.totalorder %s122, %s136
      %p138 = scmp.eq.s32.totalorder %s28, 0
      %p139 = por %p137, %p138
      %s141 = sadd.s32 %s140, 1
      %p144 = scmp.eq.s32.totalorder %s22, 1
      %p145 = scmp.ne.s32.totalorder %s140, %s142
      %p146 = scmp.eq.s32.totalorder %s22, 0
      %p147 = por %p145, %p146
      %p148 = scmp.ne.s32.totalorder %s140, %s142
      %p149 = scmp.eq.s32.totalorder %s27, 1
      %p150 = por %p148, %p149
      %p151 = scmp.ne.s32.totalorder %s142, %s143
      %p152 = scmp.eq.s32.totalorder %s27, 0
      %p153 = por %p151, %p152
      %p154 = scmp.ne.s32.totalorder %s142, %s143
      %p155 = scmp.eq.s32.totalorder %s28, 1
      %p156 = por %p154, %p155
      %p158 = scmp.ne.s32.totalorder %s143, %s157
      %p159 = scmp.eq.s32.totalorder %s28, 0
      %p160 = por %p158, %p159
      %s162 = sadd.s32 %s161, 1
      %p165 = scmp.eq.s32.totalorder %s22, 1
      %p166 = scmp.ne.s32.totalorder %s161, %s163
      %p167 = scmp.eq.s32.totalorder %s22, 0
      %p168 = por %p166, %p167
      %p169 = scmp.ne.s32.totalorder %s161, %s163
      %p170 = scmp.eq.s32.totalorder %s27, 1
      %p171 = por %p169, %p170
      %p172 = scmp.ne.s32.totalorder %s163, %s164
      %p173 = scmp.eq.s32.totalorder %s27, 0
      %p174 = por %p172, %p173
      %p175 = scmp.ne.s32.totalorder %s163, %s164
      %p176 = scmp.eq.s32.totalorder %s28, 1
      %p177 = por %p175, %p176
      %p179 = scmp.ne.s32.totalorder %s164, %s178
      %p180 = scmp.eq.s32.totalorder %s28, 0
      %p181 = por %p179, %p180
      %s183 = sadd.s32 %s182, 1
      %p186 = scmp.eq.s32.totalorder %s22, 1
      %p187 = scmp.ne.s32.totalorder %s182, %s184
      %p188 = scmp.eq.s32.totalorder %s22, 0
      %p189 = por %p187, %p188
      %p190 = scmp.ne.s32.totalorder %s182, %s184
      %p191 = scmp.eq.s32.totalorder %s27, 1
      %p192 = por %p190, %p191
      %p193 = scmp.ne.s32.totalorder %s184, %s185
      %p194 = scmp.eq.s32.totalorder %s27, 0
      %p195 = por %p193, %p194
      %p196 = scmp.ne.s32.totalorder %s184, %s185
      %p197 = scmp.eq.s32.totalorder %s28, 1
      %p198 = por %p196, %p197
      %p200 = scmp.ne.s32.totalorder %s185, %s199
      %p201 = scmp.eq.s32.totalorder %s28, 0
      %p202 = por %p200, %p201
      %s204 = sadd.s32 %s203, 1
      %p207 = scmp.eq.s32.totalorder %s22, 1
      %p208 = scmp.ne.s32.totalorder %s203, %s205
      %p209 = scmp.eq.s32.totalorder %s22, 0
      %p210 = por %p208, %p209
      %p211 = scmp.ne.s32.totalorder %s203, %s205
      %p212 = scmp.eq.s32.totalorder %s27, 1
      %p213 = por %p211, %p212
      %p214 = scmp.ne.s32.totalorder %s205, %s206
      %p215 = scmp.eq.s32.totalorder %s27, 0
      %p216 = por %p214, %p215
      %p217 = scmp.ne.s32.totalorder %s205, %s206
      %p218 = scmp.eq.s32.totalorder %s28, 1
      %p219 = por %p217, %p218
      %p221 = scmp.ne.s32.totalorder %s206, %s220
      %p222 = scmp.eq.s32.totalorder %s28, 0
      %p223 = por %p221, %p222
      %s225 = sadd.s32 %s224, 1
      %p228 = scmp.eq.s32.totalorder %s22, 1
      %p229 = scmp.ne.s32.totalorder %s224, %s226
      %p230 = scmp.eq.s32.totalorder %s22, 0
      %p231 = por %p229, %p230
      %p232 = scmp.ne.s32.totalorder %s224, %s226
      %p233 = scmp.eq.s32.totalorder %s27, 1
      %p234 = por %p232, %p233
      %p235 = scmp.ne.s32.totalorder %s226, %s227
      %p236 = scmp.eq.s32.totalorder %s27, 0
      %p237 = por %p235, %p236
      %p238 = scmp.ne.s32.totalorder %s226, %s227
      %p239 = scmp.eq.s32.totalorder %s28, 1
      %p240 = por %p238, %p239
      %p242 = scmp.ne.s32.totalorder %s227, %s241
      %p243 = scmp.eq.s32.totalorder %s28, 0
      %p244 = por %p242, %p243
      %s246 = sadd.s32 %s245, 1
      %p249 = scmp.eq.s32.totalorder %s22, 1
      %p250 = scmp.ne.s32.totalorder %s245, %s247
      %p251 = scmp.eq.s32.totalorder %s22, 0
      %p252 = por %p250, %p251
      %p253 = scmp.ne.s32.totalorder %s245, %s247
      %p254 = scmp.eq.s32.totalorder %s27, 1
      %p255 = por %p253, %p254
      %p256 = scmp.ne.s32.totalorder %s247, %s248
      %p257 = scmp.eq.s32.totalorder %s27, 0
      %p258 = por %p256, %p257
      %p259 = scmp.ne.s32.totalorder %s247, %s248
      %p260 = scmp.eq.s32.totalorder %s28, 1
      %p261 = por %p259, %p260
      %p263 = scmp.ne.s32.totalorder %s248, %s262
      %p264 = scmp.eq.s32.totalorder %s28, 0
      %p265 = por %p263, %p264
      %s267 = sadd.s32 %s266, 1
      %p270 = scmp.eq.s32.totalorder %s22, 1
      %p271 = scmp.ne.s32.totalorder %s266, %s268
      %p272 = scmp.eq.s32.totalorder %s22, 0
      %p273 = por %p271, %p272
      %p274 = scmp.ne.s32.totalorder %s266, %s268
      %p275 = scmp.eq.s32.totalorder %s27, 1
      %p276 = por %p274, %p275
      %p277 = scmp.ne.s32.totalorder %s268, %s269
      %p278 = scmp.eq.s32.totalorder %s27, 0
      %p279 = por %p277, %p278
      %p280 = scmp.ne.s32.totalorder %s268, %s269
      %p281 = scmp.eq.s32.totalorder %s28, 1
      %p282 = por %p280, %p281
      %p284 = scmp.ne.s32.totalorder %s269, %s283
      %p285 = scmp.eq.s32.totalorder %s28, 0
      %p286 = por %p284, %p285
      %s288 = sadd.s32 %s287, 1
      %p291 = scmp.eq.s32.totalorder %s22, 1
      %p292 = scmp.ne.s32.totalorder %s287, %s289
      %p293 = scmp.eq.s32.totalorder %s22, 0
      %p294 = por %p292, %p293
      %p295 = scmp.ne.s32.totalorder %s287, %s289
      %p296 = scmp.eq.s32.totalorder %s27, 1
      %p297 = por %p295, %p296
      %p298 = scmp.ne.s32.totalorder %s289, %s290
      %p299 = scmp.eq.s32.totalorder %s27, 0
      %p300 = por %p298, %p299
      %p301 = scmp.ne.s32.totalorder %s289, %s290
      %p302 = scmp.eq.s32.totalorder %s28, 1
      %p303 = por %p301, %p302
      %p305 = scmp.ne.s32.totalorder %s290, %s304
      %p306 = scmp.eq.s32.totalorder %s28, 0
      %p307 = por %p305, %p306
      %s308 = ssub.s32 %s22, %s29
      %p309 = scmp.eq.s32.totalorder %s308, 0
      %s311 = sadd.s32 %s310, 1
      %s312 = scalar_select %p309, %s310, %s311
      %p315 = pneg %p309
      %p316 = scmp.eq.s32.totalorder %s22, 1
      %p317 = por %p315, %p316
      %p318 = scmp.ne.s32.totalorder %s310, %s313
      %p319 = scmp.eq.s32.totalorder %s22, 0
      %p320 = por %p318, %p319
      %p321 = scmp.ne.s32.totalorder %s310, %s313
      %p322 = scmp.eq.s32.totalorder %s27, 1
      %p323 = por %p321, %p322
      %p324 = scmp.ne.s32.totalorder %s313, %s314
      %p325 = scmp.eq.s32.totalorder %s27, 0
      %p326 = por %p324, %p325
      %p327 = scmp.ne.s32.totalorder %s313, %s314
      %p328 = scmp.eq.s32.totalorder %s28, 1
      %p329 = por %p327, %p328
      %p331 = scmp.ne.s32.totalorder %s314, %s330
      %p332 = scmp.eq.s32.totalorder %s28, 0
      %p333 = por %p331, %p332
      %p334 = scmp.le.s32.totalorder 1, %s22
      %p335 = scmp.lt.s32.totalorder %s22, 3
      %p336 = pnand %p334, %p335
      %p337 = pneg %p336
      // Predicated region
      $region9: #{tpu_custom_call.1} parent=5 // pred_check
        _
      $region10: #{tpu_custom_call.1} parent=5 // pred_check_branch
        %339 = sbr.rel (%p336) target = $region12
      $region11: #{tpu_custom_call.1} parent=5 // pred_region
        %s340 = ssub.s32 %s22, 1
        // Predicated region
        $region13: #{tpu_custom_call.1} parent=11 // pred_check
          %p341 = pneg %p69
        $region14: #{tpu_custom_call.1} parent=11 // pred_check_branch
          %343 = sbr.rel (%p341) target = $region16
        $region15: #{tpu_custom_call.1} parent=11 // pred_region
          _
        $region16: #{tpu_custom_call.1} parent=11 // pred_fallthru
          _
        // Predicated region
        $region17: #{tpu_custom_call.1} parent=11 // pred_check
          %p344 = pneg %p90
        $region18: #{tpu_custom_call.1} parent=11 // pred_check_branch
          %346 = sbr.rel (%p344) target = $region20
        $region19: #{tpu_custom_call.1} parent=11 // pred_region
          _
        $region20: #{tpu_custom_call.1} parent=11 // pred_fallthru
          _
        // Predicated region
        $region21: #{tpu_custom_call.1} parent=11 // pred_check
          %p347 = pneg %p111
        $region22: #{tpu_custom_call.1} parent=11 // pred_check_branch
          %349 = sbr.rel (%p347) target = $region24
        $region23: #{tpu_custom_call.1} parent=11 // pred_region
          _
        $region24: #{tpu_custom_call.1} parent=11 // pred_fallthru
          _
        // Predicated region
        $region25: #{tpu_custom_call.1} parent=11 // pred_check
          %p350 = pneg %p132
        $region26: #{tpu_custom_call.1} parent=11 // pred_check_branch
          %352 = sbr.rel (%p350) target = $region28
        $region27: #{tpu_custom_call.1} parent=11 // pred_region
          _
        $region28: #{tpu_custom_call.1} parent=11 // pred_fallthru
          _
        // Predicated region
        $region29: #{tpu_custom_call.1} parent=11 // pred_check
          %p353 = pneg %p153
        $region30: #{tpu_custom_call.1} parent=11 // pred_check_branch
          %355 = sbr.rel (%p353) target = $region32
        $region31: #{tpu_custom_call.1} parent=11 // pred_region
          _
        $region32: #{tpu_custom_call.1} parent=11 // pred_fallthru
          _
        // Predicated region
        $region33: #{tpu_custom_call.1} parent=11 // pred_check
          %p356 = pneg %p174
        $region34: #{tpu_custom_call.1} parent=11 // pred_check_branch
          %358 = sbr.rel (%p356) target = $region36
        $region35: #{tpu_custom_call.1} parent=11 // pred_region
          _
        $region36: #{tpu_custom_call.1} parent=11 // pred_fallthru
          _
        // Predicated region
        $region37: #{tpu_custom_call.1} parent=11 // pred_check
          %p359 = pneg %p195
        $region38: #{tpu_custom_call.1} parent=11 // pred_check_branch
          %361 = sbr.rel (%p359) target = $region40
        $region39: #{tpu_custom_call.1} parent=11 // pred_region
          _
        $region40: #{tpu_custom_call.1} parent=11 // pred_fallthru
          _
        // Predicated region
        $region41: #{tpu_custom_call.1} parent=11 // pred_check
          %p362 = pneg %p216
        $region42: #{tpu_custom_call.1} parent=11 // pred_check_branch
          %364 = sbr.rel (%p362) target = $region44
        $region43: #{tpu_custom_call.1} parent=11 // pred_region
          _
        $region44: #{tpu_custom_call.1} parent=11 // pred_fallthru
          _
        // Predicated region
        $region45: #{tpu_custom_call.1} parent=11 // pred_check
          %p365 = pneg %p237
        $region46: #{tpu_custom_call.1} parent=11 // pred_check_branch
          %367 = sbr.rel (%p365) target = $region48
        $region47: #{tpu_custom_call.1} parent=11 // pred_region
          _
        $region48: #{tpu_custom_call.1} parent=11 // pred_fallthru
          _
        // Predicated region
        $region49: #{tpu_custom_call.1} parent=11 // pred_check
          %p368 = pneg %p258
        $region50: #{tpu_custom_call.1} parent=11 // pred_check_branch
          %370 = sbr.rel (%p368) target = $region52
        $region51: #{tpu_custom_call.1} parent=11 // pred_region
          _
        $region52: #{tpu_custom_call.1} parent=11 // pred_fallthru
          _
        // Predicated region
        $region53: #{tpu_custom_call.1} parent=11 // pred_check
          %p371 = pneg %p279
        $region54: #{tpu_custom_call.1} parent=11 // pred_check_branch
          %373 = sbr.rel (%p371) target = $region56
        $region55: #{tpu_custom_call.1} parent=11 // pred_region
          _
        $region56: #{tpu_custom_call.1} parent=11 // pred_fallthru
          _
        // Predicated region
        $region57: #{tpu_custom_call.1} parent=11 // pred_check
          %p374 = pneg %p300
        $region58: #{tpu_custom_call.1} parent=11 // pred_check_branch
          %376 = sbr.rel (%p374) target = $region60
        $region59: #{tpu_custom_call.1} parent=11 // pred_region
          _
        $region60: #{tpu_custom_call.1} parent=11 // pred_fallthru
          _
      $region12: #{tpu_custom_call.1} parent=5 // pred_fallthru
        _
      %p377 = scmp.lt.s32.totalorder %s22, 2
      // Predicated region
      $region61: #{tpu_custom_call.1} parent=5 // pred_check
        %p378 = pneg %p377
      $region62: #{tpu_custom_call.1} parent=5 // pred_check_branch
        %380 = sbr.rel (%p378) target = $region64
      $region63: #{tpu_custom_call.1} parent=5 // pred_region
        // Predicated region
        $region65: #{tpu_custom_call.1} parent=63 // pred_check
          %p381 = pneg %p42
        $region66: #{tpu_custom_call.1} parent=63 // pred_check_branch
          %383 = sbr.rel (%p381) target = $region68
        $region67: #{tpu_custom_call.1} parent=63 // pred_region
          %s384 = smul.u32 16, %s22
          %p385 = scmp.lt.s32.totalorder %s384, 31
          %s386 = scalar_select %p385, %s384, 31
          %s387 = smul.addr %s386, 8
          %s388 = scalar_lea.vmem %s0, %s387
          %s389 = smul.u32 16, %s22
        $region68: #{tpu_custom_call.1} parent=63 // pred_fallthru
          _
      $region64: #{tpu_custom_call.1} parent=5 // pred_fallthru
        _
      %p390 = scmp.le.s32.totalorder 1, %s22
      %p391 = scmp.lt.s32.totalorder %s22, 3
      %p392 = pnand %p390, %p391
      %p393 = pneg %p392
      // Predicated region
      $region69: #{tpu_custom_call.1} parent=5 // pred_check
        _
      $region70: #{tpu_custom_call.1} parent=5 // pred_check_branch
        %395 = sbr.rel (%p392) target = $region72
      $region71: #{tpu_custom_call.1} parent=5 // pred_region
        %s396 = ssub.s32 %s22, 1
        %s397 = smul.u32 16, %s27
        %p398 = scmp.lt.s32.totalorder %s397, 31
        %s399 = scalar_select %p398, %s397, 31
        %s400 = smul.addr %s399, 8
        %s401 = scalar_lea.vmem %s0, %s400
        %p402 = pneg %p48
        %p403 = pneg %p45
        %p404 = pneg %p69
        %p405 = pneg %p66
        %p406 = pneg %p90
        %p407 = pneg %p87
        %p408 = pneg %p111
        %p409 = pneg %p108
        %p410 = pneg %p132
        %p411 = pneg %p129
        %p412 = pneg %p153
        %p413 = pneg %p150
        %p414 = pneg %p174
        %p415 = pneg %p171
        %p416 = pneg %p195
        %p417 = pneg %p192
        %p418 = pneg %p216
        %p419 = pneg %p213
        %p420 = pneg %p237
        %p421 = pneg %p234
        %p422 = pneg %p258
        %p423 = pneg %p255
        %p424 = pneg %p279
        %p425 = pneg %p276
        %p426 = pneg %p300
        %p427 = pneg %p297
        %p428 = pneg %p326
        %p429 = pneg %p323
        %s430 = sand.u32 %s313, 1
        %s431 = scalar_lea.sflag [#allocation3], %s430
        %s432 = sand.u32 %s313, 1
        %s433 = smul.addr %s432, 64
        %s434 = scalar_lea.vmem [#allocation2], %s433
        %s435 = smul.u32 16, %s27
        %p436 = scmp.lt.s32.totalorder %s435, 31
        %s437 = scalar_select %p436, %s435, 31
        %s438 = smul.addr %s437, 8
        %s439 = scalar_lea.vmem %s0, %s438
        %s440 = smul.u32 16, %s27
        %s441 = smul.u32 16, %s27
        %v443 = vld [vmem:[%s439] sm:$0xff]
        %v444 = vld [vmem:[%s439 + $0x8] sm:$0xff]
        %v445 = vld [vmem:[%s439 + $0x10] sm:$0xff]
        %v446 = vld [vmem:[%s439 + $0x18] sm:$0xff]
        %v447 = vld [vmem:[%s439 + $0x20] sm:$0xff]
        %v448 = vld [vmem:[%s439 + $0x28] sm:$0xff]
        %v449 = vld [vmem:[%s439 + $0x30] sm:$0xff]
        %v450 = vld [vmem:[%s439 + $0x38] sm:$0xff]
        %v451 = vld [vmem:[%s439 + $0x40] sm:$0xff]
        %v452 = vld [vmem:[%s439 + $0x48] sm:$0xff]
        %v453 = vld [vmem:[%s439 + $0x50] sm:$0xff]
        %v454 = vld [vmem:[%s439 + $0x58] sm:$0xff]
        %v455 = vld [vmem:[%s439 + $0x60] sm:$0xff]
        %v456 = vld [vmem:[%s439 + $0x68] sm:$0xff]
        %v457 = vld [vmem:[%s439 + $0x70] sm:$0xff]
        %v458 = vld [vmem:[%s439 + $0x78] sm:$0xff]
        %v459 = vpack.c.bf16 %v444, %v443
        %v460 = vpack.c.bf16 %v446, %v445
        %v461 = vpack.c.bf16 %v448, %v447
        %v462 = vpack.c.bf16 %v450, %v449
        %v463 = vpack.c.bf16 %v452, %v451
        %v464 = vpack.c.bf16 %v454, %v453
        %v465 = vpack.c.bf16 %v456, %v455
        %v466 = vpack.c.bf16 %v458, %v457
        %v467 = vld [vmem:[%s1] sm:$0xf]
        %v468 = vld [vmem:[%s1 + $0x4] sm:$0xf]
        %v469 = vld [vmem:[%s1 + $0x8] sm:$0xf]
        %v470 = vld [vmem:[%s1 + $0xc] sm:$0xf]
        %v471 = vld [vmem:[%s1 + $0x10] sm:$0xf]
        %v472 = vld [vmem:[%s1 + $0x14] sm:$0xf]
        %v473 = vld [vmem:[%s1 + $0x18] sm:$0xf]
        %v474 = vld [vmem:[%s1 + $0x1c] sm:$0xf]
        %v475 = vld [vmem:[%s2] sm:$0x1]
        %v477 = vlaneseq
        %v478 = vshrl.u32 %v477, 7
        %v479 = vsub.s32 0, %v478
        %v480 = vrot.slane %v475, %v479
        %v490 = vunpack.c.l.b16 %v467
        %v491 = vunpack.c.l.b16 %v468
        %v492 = vunpack.c.l.b16 %v469
        %v493 = vunpack.c.l.b16 %v470
        %v494 = vunpack.c.l.b16 %v471
        %v495 = vunpack.c.l.b16 %v472
        %v496 = vunpack.c.l.b16 %v473
        %v497 = vunpack.c.l.b16 %v474
        %v498 = vpack.c.b16 %v491, %v490
        %v499 = vpack.c.b16 %v493, %v492
        %v500 = vpack.c.b16 %v495, %v494
        %v501 = vpack.c.b16 %v497, %v496
        %vm506 = vcmask 523264
        %v508 = vsel %vm506, %v459, 0
        %v511 = vsel %vm506, %v460, 0
        %v514 = vsel %vm506, %v461, 0
        %v517 = vsel %vm506, %v462, 0
        %v520 = vsel %vm506, %v463, 0
        %v523 = vsel %vm506, %v464, 0
        %v526 = vsel %vm506, %v465, 0
        %v529 = vsel %vm506, %v466, 0
        %531 = vmatprep.subr.bf16.mxu0 0
        %532 = vmatpush1.bf16.msra.mxu0 %v498
        %533 = vmatprep.subr.bf16.mxu0 0
        %534 = vmatpush1.bf16.msra.mxu0 %v499
        %535 = vmatprep.subr.bf16.mxu0 0
        %536 = vmatpush1.bf16.msra.mxu0 %v500
        %537 = vmatprep.subr.bf16.mxu0 0
        %538 = vmatpush1.bf16.msra.mxu0 %v501
        %539 = vmatprep.subr.bf16.mxu0 0
        %540 = vmatpush1.bf16.msra.mxu0 0
        %541 = vmatprep.subr.bf16.mxu0 0
        %542 = vmatpush1.bf16.msra.mxu0 0
        %543 = vmatprep.subr.bf16.mxu0 0
        %544 = vmatpush1.bf16.msra.mxu0 0
        %545 = vmatprep.subr.bf16.mxu0 0
        %546 = vmatpush1.bf16.msra.mxu0 0
        %547 = vmatprep.subr.bf16.mxu0 0
        %548 = vmatpush1.bf16.msra.mxu0 0
        %549 = vmatprep.subr.bf16.mxu0 0
        %550 = vmatpush1.bf16.msra.mxu0 0
        %551 = vmatprep.subr.bf16.mxu0 0
        %552 = vmatpush1.bf16.msra.mxu0 0
        %553 = vmatprep.subr.bf16.mxu0 0
        %554 = vmatpush1.bf16.msra.mxu0 0
        %555 = vmatprep.subr.bf16.mxu0 0
        %556 = vmatpush1.bf16.msra.mxu0 0
        %557 = vmatprep.subr.bf16.mxu0 0
        %558 = vmatpush1.bf16.msra.mxu0 0
        %559 = vmatprep.subr.bf16.mxu0 0
        %560 = vmatpush1.bf16.msra.mxu0 0
        %561 = vmatprep.subr.bf16.mxu0 0
        %562 = vmatpush1.bf16.msra.mxu0 0
        %563 = vmatprep.mubr.bf16.mxu0 0
        %564 = vmatmul.mubr.bf16.gmra.mrb[0].mxu0 %v508
        %v565 = vpop.f32.mrb[0].mxu0
        %v566 = vadd.f32 %v480, %v565
        %v567 = vpop.f32.mrb[0].mxu0
        %v568 = vpop.f32.mrb[0].mxu0
        %v569 = vadd.f32 %v480, %v568
        %v570 = vpop.f32.mrb[0].mxu0
        %571 = vmatprep.mubr.bf16.mxu0 0
        %572 = vmatmul.mubr.bf16.gmra.mrb[0].mxu0 %v511
        %v573 = vpop.f32.mrb[0].mxu0
        %v574 = vadd.f32 %v480, %v573
        %v575 = vpop.f32.mrb[0].mxu0
        %v576 = vpop.f32.mrb[0].mxu0
        %v577 = vadd.f32 %v480, %v576
        %v578 = vpop.f32.mrb[0].mxu0
        %579 = vmatprep.mubr.bf16.mxu0 0
        %580 = vmatmul.mubr.bf16.gmra.mrb[0].mxu0 %v514
        %v581 = vpop.f32.mrb[0].mxu0
        %v582 = vadd.f32 %v480, %v581
        %v583 = vpop.f32.mrb[0].mxu0
        %v584 = vpop.f32.mrb[0].mxu0
        %v585 = vadd.f32 %v480, %v584
        %v586 = vpop.f32.mrb[0].mxu0
        %587 = vmatprep.mubr.bf16.mxu0 0
        %588 = vmatmul.mubr.bf16.gmra.mrb[0].mxu0 %v517
        %v589 = vpop.f32.mrb[0].mxu0
        %v590 = vadd.f32 %v480, %v589
        %v591 = vpop.f32.mrb[0].mxu0
        %v592 = vpop.f32.mrb[0].mxu0
        %v593 = vadd.f32 %v480, %v592
        %v594 = vpop.f32.mrb[0].mxu0
        %595 = vmatprep.mubr.bf16.mxu0 0
        %596 = vmatmul.mubr.bf16.gmra.mrb[0].mxu0 %v520
        %v597 = vpop.f32.mrb[0].mxu0
        %v598 = vadd.f32 %v480, %v597
        %v599 = vpop.f32.mrb[0].mxu0
        %v600 = vpop.f32.mrb[0].mxu0
        %v601 = vadd.f32 %v480, %v600
        %v602 = vpop.f32.mrb[0].mxu0
        %603 = vmatprep.mubr.bf16.mxu0 0
        %604 = vmatmul.mubr.bf16.gmra.mrb[0].mxu0 %v523
        %v605 = vpop.f32.mrb[0].mxu0
        %v606 = vadd.f32 %v480, %v605
        %v607 = vpop.f32.mrb[0].mxu0
        %v608 = vpop.f32.mrb[0].mxu0
        %v609 = vadd.f32 %v480, %v608
        %v610 = vpop.f32.mrb[0].mxu0
        %611 = vmatprep.mubr.bf16.mxu0 0
        %612 = vmatmul.mubr.bf16.gmra.mrb[0].mxu0 %v526
        %v613 = vpop.f32.mrb[0].mxu0
        %v614 = vadd.f32 %v480, %v613
        %v615 = vpop.f32.mrb[0].mxu0
        %v616 = vpop.f32.mrb[0].mxu0
        %v617 = vadd.f32 %v480, %v616
        %v618 = vpop.f32.mrb[0].mxu0
        %619 = vmatprep.mubr.bf16.mxu0 0
        %620 = vmatmul.mubr.bf16.gmra.mrb[0].mxu0 %v529
        %v621 = vpop.f32.mrb[0].mxu0
        %v622 = vadd.f32 %v480, %v621
        %v623 = vpop.f32.mrb[0].mxu0
        %v624 = vpop.f32.mrb[0].mxu0
        %v625 = vadd.f32 %v480, %v624
        %v626 = vpop.f32.mrb[0].mxu0
        %627 = vdwg.mxu0
        %v628 = vmax.f32 %v566, 0.0
        %v629 = vmax.f32 %v569, 0.0
        %v630 = vmax.f32 %v574, 0.0
        %v631 = vmax.f32 %v577, 0.0
        %v632 = vmax.f32 %v582, 0.0
        %v633 = vmax.f32 %v585, 0.0
        %v634 = vmax.f32 %v590, 0.0
        %v635 = vmax.f32 %v593, 0.0
        %v636 = vmax.f32 %v598, 0.0
        %v637 = vmax.f32 %v601, 0.0
        %v638 = vmax.f32 %v606, 0.0
        %v639 = vmax.f32 %v609, 0.0
        %v640 = vmax.f32 %v614, 0.0
        %v641 = vmax.f32 %v617, 0.0
        %v642 = vmax.f32 %v622, 0.0
        %v643 = vmax.f32 %v625, 0.0
        %v644 = vpack.c.bf16 %v629, %v628
        %v645 = vpack.c.bf16 %v631, %v630
        %v646 = vpack.c.bf16 %v633, %v632
        %v647 = vpack.c.bf16 %v635, %v634
        %v648 = vpack.c.bf16 %v637, %v636
        %v649 = vpack.c.bf16 %v639, %v638
        %v650 = vpack.c.bf16 %v641, %v640
        %v651 = vpack.c.bf16 %v643, %v642
        %v652 = vld [vmem:[%s3] sm:$0xf]
        %v653 = vld [vmem:[%s3 + $0x4] sm:$0xf]
        %v654 = vld [vmem:[%s3 + $0x8] sm:$0xf]
        %v655 = vld [vmem:[%s3 + $0xc] sm:$0xf]
        %v656 = vld [vmem:[%s3 + $0x10] sm:$0xf]
        %v657 = vld [vmem:[%s3 + $0x14] sm:$0xf]
        %v658 = vld [vmem:[%s3 + $0x18] sm:$0xf]
        %v659 = vld [vmem:[%s3 + $0x1c] sm:$0xf]
        %v660 = vld [vmem:[%s3 + $0x20] sm:$0xf]
        %v661 = vld [vmem:[%s3 + $0x24] sm:$0xf]
        %v662 = vld [vmem:[%s3 + $0x28] sm:$0xf]
        %v663 = vld [vmem:[%s3 + $0x2c] sm:$0xf]
        %v664 = vld [vmem:[%s3 + $0x30] sm:$0xf]
        %v665 = vld [vmem:[%s3 + $0x34] sm:$0xf]
        %v666 = vld [vmem:[%s3 + $0x38] sm:$0xf]
        %v667 = vld [vmem:[%s3 + $0x3c] sm:$0xf]
        %v668 = vld [vmem:[%s4] sm:$0x1]
        %v670 = vlaneseq
        %v671 = vshrl.u32 %v670, 7
        %v672 = vsub.s32 0, %v671
        %v673 = vrot.slane %v668, %v672
        %v691 = vunpack.c.l.b16 %v652
        %v692 = vunpack.c.l.b16 %v653
        %v693 = vunpack.c.l.b16 %v654
        %v694 = vunpack.c.l.b16 %v655
        %v695 = vunpack.c.l.b16 %v656
        %v696 = vunpack.c.l.b16 %v657
        %v697 = vunpack.c.l.b16 %v658
        %v698 = vunpack.c.l.b16 %v659
        %v699 = vunpack.c.l.b16 %v660
        %v700 = vunpack.c.l.b16 %v661
        %v701 = vunpack.c.l.b16 %v662
        %v702 = vunpack.c.l.b16 %v663
        %v703 = vunpack.c.l.b16 %v664
        %v704 = vunpack.c.l.b16 %v665
        %v705 = vunpack.c.l.b16 %v666
        %v706 = vunpack.c.l.b16 %v667
        %v707 = vpack.c.b16 %v692, %v691
        %v708 = vpack.c.b16 %v694, %v693
        %v709 = vpack.c.b16 %v696, %v695
        %v710 = vpack.c.b16 %v698, %v697
        %v711 = vpack.c.b16 %v700, %v699
        %v712 = vpack.c.b16 %v702, %v701
        %v713 = vpack.c.b16 %v704, %v703
        %v714 = vpack.c.b16 %v706, %v705
        %723 = vmatprep.subr.bf16.mxu0 0
        %724 = vmatpush1.bf16.msra.mxu0 %v707
        %725 = vmatprep.subr.bf16.mxu0 0
        %726 = vmatpush1.bf16.msra.mxu0 %v708
        %727 = vmatprep.subr.bf16.mxu0 0
        %728 = vmatpush1.bf16.msra.mxu0 %v709
        %729 = vmatprep.subr.bf16.mxu0 0
        %730 = vmatpush1.bf16.msra.mxu0 %v710
        %731 = vmatprep.subr.bf16.mxu0 0
        %732 = vmatpush1.bf16.msra.mxu0 %v711
        %733 = vmatprep.subr.bf16.mxu0 0
        %734 = vmatpush1.bf16.msra.mxu0 %v712
        %735 = vmatprep.subr.bf16.mxu0 0
        %736 = vmatpush1.bf16.msra.mxu0 %v713
        %737 = vmatprep.subr.bf16.mxu0 0
        %738 = vmatpush1.bf16.msra.mxu0 %v714
        %739 = vmatprep.subr.bf16.mxu0 0
        %740 = vmatpush1.bf16.msra.mxu0 0
        %741 = vmatprep.subr.bf16.mxu0 0
        %742 = vmatpush1.bf16.msra.mxu0 0
        %743 = vmatprep.subr.bf16.mxu0 0
        %744 = vmatpush1.bf16.msra.mxu0 0
        %745 = vmatprep.subr.bf16.mxu0 0
        %746 = vmatpush1.bf16.msra.mxu0 0
        %747 = vmatprep.subr.bf16.mxu0 0
        %748 = vmatpush1.bf16.msra.mxu0 0
        %749 = vmatprep.subr.bf16.mxu0 0
        %750 = vmatpush1.bf16.msra.mxu0 0
        %751 = vmatprep.subr.bf16.mxu0 0
        %752 = vmatpush1.bf16.msra.mxu0 0
        %753 = vmatprep.subr.bf16.mxu0 0
        %754 = vmatpush1.bf16.msra.mxu0 0
        %755 = vmatprep.mubr.bf16.mxu0 0
        %756 = vmatmul.mubr.bf16.gmra.mrb[0].mxu0 %v644
        %v757 = vpop.f32.mrb[0].mxu0
        %v758 = vadd.f32 %v673, %v757
        %v759 = vpop.f32.mrb[0].mxu0
        %v760 = vpop.f32.mrb[0].mxu0
        %v761 = vadd.f32 %v673, %v760
        %v762 = vpop.f32.mrb[0].mxu0
        %763 = vmatprep.mubr.bf16.mxu0 0
        %764 = vmatmul.mubr.bf16.gmra.mrb[0].mxu0 %v645
        %v765 = vpop.f32.mrb[0].mxu0
        %v766 = vadd.f32 %v673, %v765
        %v767 = vpop.f32.mrb[0].mxu0
        %v768 = vpop.f32.mrb[0].mxu0
        %v769 = vadd.f32 %v673, %v768
        %v770 = vpop.f32.mrb[0].mxu0
        %771 = vmatprep.mubr.bf16.mxu0 0
        %772 = vmatmul.mubr.bf16.gmra.mrb[0].mxu0 %v646
        %v773 = vpop.f32.mrb[0].mxu0
        %v774 = vadd.f32 %v673, %v773
        %v775 = vpop.f32.mrb[0].mxu0
        %v776 = vpop.f32.mrb[0].mxu0
        %v777 = vadd.f32 %v673, %v776
        %v778 = vpop.f32.mrb[0].mxu0
        %779 = vmatprep.mubr.bf16.mxu0 0
        %780 = vmatmul.mubr.bf16.gmra.mrb[0].mxu0 %v647
        %v781 = vpop.f32.mrb[0].mxu0
        %v782 = vadd.f32 %v673, %v781
        %v783 = vpop.f32.mrb[0].mxu0
        %v784 = vpop.f32.mrb[0].mxu0
        %v785 = vadd.f32 %v673, %v784
        %v786 = vpop.f32.mrb[0].mxu0
        %787 = vmatprep.mubr.bf16.mxu0 0
        %788 = vmatmul.mubr.bf16.gmra.mrb[0].mxu0 %v648
        %v789 = vpop.f32.mrb[0].mxu0
        %v790 = vadd.f32 %v673, %v789
        %v791 = vpop.f32.mrb[0].mxu0
        %v792 = vpop.f32.mrb[0].mxu0
        %v793 = vadd.f32 %v673, %v792
        %v794 = vpop.f32.mrb[0].mxu0
        %795 = vmatprep.mubr.bf16.mxu0 0
        %796 = vmatmul.mubr.bf16.gmra.mrb[0].mxu0 %v649
        %v797 = vpop.f32.mrb[0].mxu0
        %v798 = vadd.f32 %v673, %v797
        %v799 = vpop.f32.mrb[0].mxu0
        %v800 = vpop.f32.mrb[0].mxu0
        %v801 = vadd.f32 %v673, %v800
        %v802 = vpop.f32.mrb[0].mxu0
        %803 = vmatprep.mubr.bf16.mxu0 0
        %804 = vmatmul.mubr.bf16.gmra.mrb[0].mxu0 %v650
        %v805 = vpop.f32.mrb[0].mxu0
        %v806 = vadd.f32 %v673, %v805
        %v807 = vpop.f32.mrb[0].mxu0
        %v808 = vpop.f32.mrb[0].mxu0
        %v809 = vadd.f32 %v673, %v808
        %v810 = vpop.f32.mrb[0].mxu0
        %811 = vmatprep.mubr.bf16.mxu0 0
        %812 = vmatmul.mubr.bf16.gmra.mrb[0].mxu0 %v651
        %v813 = vpop.f32.mrb[0].mxu0
        %v814 = vadd.f32 %v673, %v813
        %v815 = vpop.f32.mrb[0].mxu0
        %v816 = vpop.f32.mrb[0].mxu0
        %v817 = vadd.f32 %v673, %v816
        %v818 = vpop.f32.mrb[0].mxu0
        %819 = vdwg.mxu0
        %v820 = vmax.f32 %v758, 0.0
        %v821 = vmax.f32 %v761, 0.0
        %v822 = vmax.f32 %v766, 0.0
        %v823 = vmax.f32 %v769, 0.0
        %v824 = vmax.f32 %v774, 0.0
        %v825 = vmax.f32 %v777, 0.0
        %v826 = vmax.f32 %v782, 0.0
        %v827 = vmax.f32 %v785, 0.0
        %v828 = vmax.f32 %v790, 0.0
        %v829 = vmax.f32 %v793, 0.0
        %v830 = vmax.f32 %v798, 0.0
        %v831 = vmax.f32 %v801, 0.0
        %v832 = vmax.f32 %v806, 0.0
        %v833 = vmax.f32 %v809, 0.0
        %v834 = vmax.f32 %v814, 0.0
        %v835 = vmax.f32 %v817, 0.0
        %v836 = vpack.c.bf16 %v821, %v820
        %v837 = vpack.c.bf16 %v823, %v822
        %v838 = vpack.c.bf16 %v825, %v824
        %v839 = vpack.c.bf16 %v827, %v826
        %v840 = vpack.c.bf16 %v829, %v828
        %v841 = vpack.c.bf16 %v831, %v830
        %v842 = vpack.c.bf16 %v833, %v832
        %v843 = vpack.c.bf16 %v835, %v834
        %v844 = vld [vmem:[%s5] sm:$0xf]
        %v845 = vld [vmem:[%s5 + $0x4] sm:$0xf]
        %v846 = vld [vmem:[%s5 + $0x8] sm:$0xf]
        %v847 = vld [vmem:[%s5 + $0xc] sm:$0xf]
        %v848 = vld [vmem:[%s5 + $0x10] sm:$0xf]
        %v849 = vld [vmem:[%s5 + $0x14] sm:$0xf]
        %v850 = vld [vmem:[%s5 + $0x18] sm:$0xf]
        %v851 = vld [vmem:[%s5 + $0x1c] sm:$0xf]
        %v852 = vld [vmem:[%s5 + $0x20] sm:$0xf]
        %v853 = vld [vmem:[%s5 + $0x24] sm:$0xf]
        %v854 = vld [vmem:[%s5 + $0x28] sm:$0xf]
        %v855 = vld [vmem:[%s5 + $0x2c] sm:$0xf]
        %v856 = vld [vmem:[%s5 + $0x30] sm:$0xf]
        %v857 = vld [vmem:[%s5 + $0x34] sm:$0xf]
        %v858 = vld [vmem:[%s5 + $0x38] sm:$0xf]
        %v859 = vld [vmem:[%s5 + $0x3c] sm:$0xf]
        %v860 = vld [vmem:[%s6] sm:$0x1]
        %v862 = vlaneseq
        %v863 = vshrl.u32 %v862, 7
        %v864 = vsub.s32 0, %v863
        %v865 = vrot.slane %v860, %v864
        %v883 = vunpack.c.l.b16 %v844
        %v884 = vunpack.c.l.b16 %v845
        %v885 = vunpack.c.l.b16 %v846
        %v886 = vunpack.c.l.b16 %v847
        %v887 = vunpack.c.l.b16 %v848
        %v888 = vunpack.c.l.b16 %v849
        %v889 = vunpack.c.l.b16 %v850
        %v890 = vunpack.c.l.b16 %v851
        %v891 = vunpack.c.l.b16 %v852
        %v892 = vunpack.c.l.b16 %v853
        %v893 = vunpack.c.l.b16 %v854
        %v894 = vunpack.c.l.b16 %v855
        %v895 = vunpack.c.l.b16 %v856
        %v896 = vunpack.c.l.b16 %v857
        %v897 = vunpack.c.l.b16 %v858
        %v898 = vunpack.c.l.b16 %v859
        %v899 = vpack.c.b16 %v884, %v883
        %v900 = vpack.c.b16 %v886, %v885
        %v901 = vpack.c.b16 %v888, %v887
        %v902 = vpack.c.b16 %v890, %v889
        %v903 = vpack.c.b16 %v892, %v891
        %v904 = vpack.c.b16 %v894, %v893
        %v905 = vpack.c.b16 %v896, %v895
        %v906 = vpack.c.b16 %v898, %v897
        %915 = vmatprep.subr.bf16.mxu0 0
        %916 = vmatpush1.bf16.msra.mxu0 %v899
        %917 = vmatprep.subr.bf16.mxu0 0
        %918 = vmatpush1.bf16.msra.mxu0 %v900
        %919 = vmatprep.subr.bf16.mxu0 0
        %920 = vmatpush1.bf16.msra.mxu0 %v901
        %921 = vmatprep.subr.bf16.mxu0 0
        %922 = vmatpush1.bf16.msra.mxu0 %v902
        %923 = vmatprep.subr.bf16.mxu0 0
        %924 = vmatpush1.bf16.msra.mxu0 %v903
        %925 = vmatprep.subr.bf16.mxu0 0
        %926 = vmatpush1.bf16.msra.mxu0 %v904
        %927 = vmatprep.subr.bf16.mxu0 0
        %928 = vmatpush1.bf16.msra.mxu0 %v905
        %929 = vmatprep.subr.bf16.mxu0 0
        %930 = vmatpush1.bf16.msra.mxu0 %v906
        %931 = vmatprep.subr.bf16.mxu0 0
        %932 = vmatpush1.bf16.msra.mxu0 0
        %933 = vmatprep.subr.bf16.mxu0 0
        %934 = vmatpush1.bf16.msra.mxu0 0
        %935 = vmatprep.subr.bf16.mxu0 0
        %936 = vmatpush1.bf16.msra.mxu0 0
        %937 = vmatprep.subr.bf16.mxu0 0
        %938 = vmatpush1.bf16.msra.mxu0 0
        %939 = vmatprep.subr.bf16.mxu0 0
        %940 = vmatpush1.bf16.msra.mxu0 0
        %941 = vmatprep.subr.bf16.mxu0 0
        %942 = vmatpush1.bf16.msra.mxu0 0
        %943 = vmatprep.subr.bf16.mxu0 0
        %944 = vmatpush1.bf16.msra.mxu0 0
        %945 = vmatprep.subr.bf16.mxu0 0
        %946 = vmatpush1.bf16.msra.mxu0 0
        %947 = vmatprep.mubr.bf16.mxu0 0
        %948 = vmatmul.mubr.bf16.gmra.mrb[0].mxu0 %v836
        %v949 = vpop.f32.mrb[0].mxu0
        %v950 = vadd.f32 %v865, %v949
        %v951 = vpop.f32.mrb[0].mxu0
        %v952 = vpop.f32.mrb[0].mxu0
        %v953 = vadd.f32 %v865, %v952
        %v954 = vpop.f32.mrb[0].mxu0
        %955 = vmatprep.mubr.bf16.mxu0 0
        %956 = vmatmul.mubr.bf16.gmra.mrb[0].mxu0 %v837
        %v957 = vpop.f32.mrb[0].mxu0
        %v958 = vadd.f32 %v865, %v957
        %v959 = vpop.f32.mrb[0].mxu0
        %v960 = vpop.f32.mrb[0].mxu0
        %v961 = vadd.f32 %v865, %v960
        %v962 = vpop.f32.mrb[0].mxu0
        %963 = vmatprep.mubr.bf16.mxu0 0
        %964 = vmatmul.mubr.bf16.gmra.mrb[0].mxu0 %v838
        %v965 = vpop.f32.mrb[0].mxu0
        %v966 = vadd.f32 %v865, %v965
        %v967 = vpop.f32.mrb[0].mxu0
        %v968 = vpop.f32.mrb[0].mxu0
        %v969 = vadd.f32 %v865, %v968
        %v970 = vpop.f32.mrb[0].mxu0
        %971 = vmatprep.mubr.bf16.mxu0 0
        %972 = vmatmul.mubr.bf16.gmra.mrb[0].mxu0 %v839
        %v973 = vpop.f32.mrb[0].mxu0
        %v974 = vadd.f32 %v865, %v973
        %v975 = vpop.f32.mrb[0].mxu0
        %v976 = vpop.f32.mrb[0].mxu0
        %v977 = vadd.f32 %v865, %v976
        %v978 = vpop.f32.mrb[0].mxu0
        %979 = vmatprep.mubr.bf16.mxu0 0
        %980 = vmatmul.mubr.bf16.gmra.mrb[0].mxu0 %v840
        %v981 = vpop.f32.mrb[0].mxu0
        %v982 = vadd.f32 %v865, %v981
        %v983 = vpop.f32.mrb[0].mxu0
        %v984 = vpop.f32.mrb[0].mxu0
        %v985 = vadd.f32 %v865, %v984
        %v986 = vpop.f32.mrb[0].mxu0
        %987 = vmatprep.mubr.bf16.mxu0 0
        %988 = vmatmul.mubr.bf16.gmra.mrb[0].mxu0 %v841
        %v989 = vpop.f32.mrb[0].mxu0
        %v990 = vadd.f32 %v865, %v989
        %v991 = vpop.f32.mrb[0].mxu0
        %v992 = vpop.f32.mrb[0].mxu0
        %v993 = vadd.f32 %v865, %v992
        %v994 = vpop.f32.mrb[0].mxu0
        %995 = vmatprep.mubr.bf16.mxu0 0
        %996 = vmatmul.mubr.bf16.gmra.mrb[0].mxu0 %v842
        %v997 = vpop.f32.mrb[0].mxu0
        %v998 = vadd.f32 %v865, %v997
        %v999 = vpop.f32.mrb[0].mxu0
        %v1000 = vpop.f32.mrb[0].mxu0
        %v1001 = vadd.f32 %v865, %v1000
        %v1002 = vpop.f32.mrb[0].mxu0
        %1003 = vmatprep.mubr.bf16.mxu0 0
        %1004 = vmatmul.mubr.bf16.gmra.mrb[0].mxu0 %v843
        %v1005 = vpop.f32.mrb[0].mxu0
        %v1006 = vadd.f32 %v865, %v1005
        %v1007 = vpop.f32.mrb[0].mxu0
        %v1008 = vpop.f32.mrb[0].mxu0
        %v1009 = vadd.f32 %v865, %v1008
        %v1010 = vpop.f32.mrb[0].mxu0
        %1011 = vdwg.mxu0
        %v1012 = vmax.f32 %v950, 0.0
        %v1013 = vmax.f32 %v953, 0.0
        %v1014 = vmax.f32 %v958, 0.0
        %v1015 = vmax.f32 %v961, 0.0
        %v1016 = vmax.f32 %v966, 0.0
        %v1017 = vmax.f32 %v969, 0.0
        %v1018 = vmax.f32 %v974, 0.0
        %v1019 = vmax.f32 %v977, 0.0
        %v1020 = vmax.f32 %v982, 0.0
        %v1021 = vmax.f32 %v985, 0.0
        %v1022 = vmax.f32 %v990, 0.0
        %v1023 = vmax.f32 %v993, 0.0
        %v1024 = vmax.f32 %v998, 0.0
        %v1025 = vmax.f32 %v1001, 0.0
        %v1026 = vmax.f32 %v1006, 0.0
        %v1027 = vmax.f32 %v1009, 0.0
        %v1028 = vpack.c.bf16 %v1013, %v1012
        %v1029 = vpack.c.bf16 %v1015, %v1014
        %v1030 = vpack.c.bf16 %v1017, %v1016
        %v1031 = vpack.c.bf16 %v1019, %v1018
        %v1032 = vpack.c.bf16 %v1021, %v1020
        %v1033 = vpack.c.bf16 %v1023, %v1022
        %v1034 = vpack.c.bf16 %v1025, %v1024
        %v1035 = vpack.c.bf16 %v1027, %v1026
        %v1036 = vld [vmem:[%s7] sm:$0xf]
        %v1037 = vld [vmem:[%s7 + $0x4] sm:$0xf]
        %v1038 = vld [vmem:[%s7 + $0x8] sm:$0xf]
        %v1039 = vld [vmem:[%s7 + $0xc] sm:$0xf]
        %v1040 = vld [vmem:[%s7 + $0x10] sm:$0xf]
        %v1041 = vld [vmem:[%s7 + $0x14] sm:$0xf]
        %v1042 = vld [vmem:[%s7 + $0x18] sm:$0xf]
        %v1043 = vld [vmem:[%s7 + $0x1c] sm:$0xf]
        %v1044 = vld [vmem:[%s7 + $0x20] sm:$0xf]
        %v1045 = vld [vmem:[%s7 + $0x24] sm:$0xf]
        %v1046 = vld [vmem:[%s7 + $0x28] sm:$0xf]
        %v1047 = vld [vmem:[%s7 + $0x2c] sm:$0xf]
        %v1048 = vld [vmem:[%s7 + $0x30] sm:$0xf]
        %v1049 = vld [vmem:[%s7 + $0x34] sm:$0xf]
        %v1050 = vld [vmem:[%s7 + $0x38] sm:$0xf]
        %v1051 = vld [vmem:[%s7 + $0x3c] sm:$0xf]
        %v1052 = vld [vmem:[%s8] sm:$0x1]
        %v1054 = vlaneseq
        %v1055 = vshrl.u32 %v1054, 7
        %v1056 = vsub.s32 0, %v1055
        %v1057 = vrot.slane %v1052, %v1056
        %v1075 = vunpack.c.l.b16 %v1036
        %v1076 = vunpack.c.l.b16 %v1037
        %v1077 = vunpack.c.l.b16 %v1038
        %v1078 = vunpack.c.l.b16 %v1039
        %v1079 = vunpack.c.l.b16 %v1040
        %v1080 = vunpack.c.l.b16 %v1041
        %v1081 = vunpack.c.l.b16 %v1042
        %v1082 = vunpack.c.l.b16 %v1043
        %v1083 = vunpack.c.l.b16 %v1044
        %v1084 = vunpack.c.l.b16 %v1045
        %v1085 = vunpack.c.l.b16 %v1046
        %v1086 = vunpack.c.l.b16 %v1047
        %v1087 = vunpack.c.l.b16 %v1048
        %v1088 = vunpack.c.l.b16 %v1049
        %v1089 = vunpack.c.l.b16 %v1050
        %v1090 = vunpack.c.l.b16 %v1051
        %v1091 = vpack.c.b16 %v1076, %v1075
        %v1092 = vpack.c.b16 %v1078, %v1077
        %v1093 = vpack.c.b16 %v1080, %v1079
        %v1094 = vpack.c.b16 %v1082, %v1081
        %v1095 = vpack.c.b16 %v1084, %v1083
        %v1096 = vpack.c.b16 %v1086, %v1085
        %v1097 = vpack.c.b16 %v1088, %v1087
        %v1098 = vpack.c.b16 %v1090, %v1089
        %1107 = vmatprep.subr.bf16.mxu0 0
        %1108 = vmatpush1.bf16.msra.mxu0 %v1091
        %1109 = vmatprep.subr.bf16.mxu0 0
        %1110 = vmatpush1.bf16.msra.mxu0 %v1092
        %1111 = vmatprep.subr.bf16.mxu0 0
        %1112 = vmatpush1.bf16.msra.mxu0 %v1093
        %1113 = vmatprep.subr.bf16.mxu0 0
        %1114 = vmatpush1.bf16.msra.mxu0 %v1094
        %1115 = vmatprep.subr.bf16.mxu0 0
        %1116 = vmatpush1.bf16.msra.mxu0 %v1095
        %1117 = vmatprep.subr.bf16.mxu0 0
        %1118 = vmatpush1.bf16.msra.mxu0 %v1096
        %1119 = vmatprep.subr.bf16.mxu0 0
        %1120 = vmatpush1.bf16.msra.mxu0 %v1097
        %1121 = vmatprep.subr.bf16.mxu0 0
        %1122 = vmatpush1.bf16.msra.mxu0 %v1098
        %1123 = vmatprep.subr.bf16.mxu0 0
        %1124 = vmatpush1.bf16.msra.mxu0 0
        %1125 = vmatprep.subr.bf16.mxu0 0
        %1126 = vmatpush1.bf16.msra.mxu0 0
        %1127 = vmatprep.subr.bf16.mxu0 0
        %1128 = vmatpush1.bf16.msra.mxu0 0
        %1129 = vmatprep.subr.bf16.mxu0 0
        %1130 = vmatpush1.bf16.msra.mxu0 0
        %1131 = vmatprep.subr.bf16.mxu0 0
        %1132 = vmatpush1.bf16.msra.mxu0 0
        %1133 = vmatprep.subr.bf16.mxu0 0
        %1134 = vmatpush1.bf16.msra.mxu0 0
        %1135 = vmatprep.subr.bf16.mxu0 0
        %1136 = vmatpush1.bf16.msra.mxu0 0
        %1137 = vmatprep.subr.bf16.mxu0 0
        %1138 = vmatpush1.bf16.msra.mxu0 0
        %1139 = vmatprep.mubr.bf16.mxu0 0
        %1140 = vmatmul.mubr.bf16.gmra.mrb[0].mxu0 %v1028
        %v1141 = vpop.f32.mrb[0].mxu0
        %v1142 = vadd.f32 %v1057, %v1141
        %v1143 = vpop.f32.mrb[0].mxu0
        %v1144 = vpop.f32.mrb[0].mxu0
        %v1145 = vadd.f32 %v1057, %v1144
        %v1146 = vpop.f32.mrb[0].mxu0
        %1147 = vmatprep.mubr.bf16.mxu0 0
        %1148 = vmatmul.mubr.bf16.gmra.mrb[0].mxu0 %v1029
        %v1149 = vpop.f32.mrb[0].mxu0
        %v1150 = vadd.f32 %v1057, %v1149
        %v1151 = vpop.f32.mrb[0].mxu0
        %v1152 = vpop.f32.mrb[0].mxu0
        %v1153 = vadd.f32 %v1057, %v1152
        %v1154 = vpop.f32.mrb[0].mxu0
        %1155 = vmatprep.mubr.bf16.mxu0 0
        %1156 = vmatmul.mubr.bf16.gmra.mrb[0].mxu0 %v1030
        %v1157 = vpop.f32.mrb[0].mxu0
        %v1158 = vadd.f32 %v1057, %v1157
        %v1159 = vpop.f32.mrb[0].mxu0
        %v1160 = vpop.f32.mrb[0].mxu0
        %v1161 = vadd.f32 %v1057, %v1160
        %v1162 = vpop.f32.mrb[0].mxu0
        %1163 = vmatprep.mubr.bf16.mxu0 0
        %1164 = vmatmul.mubr.bf16.gmra.mrb[0].mxu0 %v1031
        %v1165 = vpop.f32.mrb[0].mxu0
        %v1166 = vadd.f32 %v1057, %v1165
        %v1167 = vpop.f32.mrb[0].mxu0
        %v1168 = vpop.f32.mrb[0].mxu0
        %v1169 = vadd.f32 %v1057, %v1168
        %v1170 = vpop.f32.mrb[0].mxu0
        %1171 = vmatprep.mubr.bf16.mxu0 0
        %1172 = vmatmul.mubr.bf16.gmra.mrb[0].mxu0 %v1032
        %v1173 = vpop.f32.mrb[0].mxu0
        %v1174 = vadd.f32 %v1057, %v1173
        %v1175 = vpop.f32.mrb[0].mxu0
        %v1176 = vpop.f32.mrb[0].mxu0
        %v1177 = vadd.f32 %v1057, %v1176
        %v1178 = vpop.f32.mrb[0].mxu0
        %1179 = vmatprep.mubr.bf16.mxu0 0
        %1180 = vmatmul.mubr.bf16.gmra.mrb[0].mxu0 %v1033
        %v1181 = vpop.f32.mrb[0].mxu0
        %v1182 = vadd.f32 %v1057, %v1181
        %v1183 = vpop.f32.mrb[0].mxu0
        %v1184 = vpop.f32.mrb[0].mxu0
        %v1185 = vadd.f32 %v1057, %v1184
        %v1186 = vpop.f32.mrb[0].mxu0
        %1187 = vmatprep.mubr.bf16.mxu0 0
        %1188 = vmatmul.mubr.bf16.gmra.mrb[0].mxu0 %v1034
        %v1189 = vpop.f32.mrb[0].mxu0
        %v1190 = vadd.f32 %v1057, %v1189
        %v1191 = vpop.f32.mrb[0].mxu0
        %v1192 = vpop.f32.mrb[0].mxu0
        %v1193 = vadd.f32 %v1057, %v1192
        %v1194 = vpop.f32.mrb[0].mxu0
        %1195 = vmatprep.mubr.bf16.mxu0 0
        %1196 = vmatmul.mubr.bf16.gmra.mrb[0].mxu0 %v1035
        %v1197 = vpop.f32.mrb[0].mxu0
        %v1198 = vadd.f32 %v1057, %v1197
        %v1199 = vpop.f32.mrb[0].mxu0
        %v1200 = vpop.f32.mrb[0].mxu0
        %v1201 = vadd.f32 %v1057, %v1200
        %v1202 = vpop.f32.mrb[0].mxu0
        %1203 = vdwg.mxu0
        %v1204 = vmax.f32 %v1142, 0.0
        %v1205 = vmax.f32 %v1145, 0.0
        %v1206 = vmax.f32 %v1150, 0.0
        %v1207 = vmax.f32 %v1153, 0.0
        %v1208 = vmax.f32 %v1158, 0.0
        %v1209 = vmax.f32 %v1161, 0.0
        %v1210 = vmax.f32 %v1166, 0.0
        %v1211 = vmax.f32 %v1169, 0.0
        %v1212 = vmax.f32 %v1174, 0.0
        %v1213 = vmax.f32 %v1177, 0.0
        %v1214 = vmax.f32 %v1182, 0.0
        %v1215 = vmax.f32 %v1185, 0.0
        %v1216 = vmax.f32 %v1190, 0.0
        %v1217 = vmax.f32 %v1193, 0.0
        %v1218 = vmax.f32 %v1198, 0.0
        %v1219 = vmax.f32 %v1201, 0.0
        %v1220 = vpack.c.bf16 %v1205, %v1204
        %v1221 = vpack.c.bf16 %v1207, %v1206
        %v1222 = vpack.c.bf16 %v1209, %v1208
        %v1223 = vpack.c.bf16 %v1211, %v1210
        %v1224 = vpack.c.bf16 %v1213, %v1212
        %v1225 = vpack.c.bf16 %v1215, %v1214
        %v1226 = vpack.c.bf16 %v1217, %v1216
        %v1227 = vpack.c.bf16 %v1219, %v1218
        %v1228 = vld [vmem:[%s9] sm:$0xf]
        %v1229 = vld [vmem:[%s9 + $0x4] sm:$0xf]
        %v1230 = vld [vmem:[%s9 + $0x8] sm:$0xf]
        %v1231 = vld [vmem:[%s9 + $0xc] sm:$0xf]
        %v1232 = vld [vmem:[%s9 + $0x10] sm:$0xf]
        %v1233 = vld [vmem:[%s9 + $0x14] sm:$0xf]
        %v1234 = vld [vmem:[%s9 + $0x18] sm:$0xf]
        %v1235 = vld [vmem:[%s9 + $0x1c] sm:$0xf]
        %v1236 = vld [vmem:[%s9 + $0x20] sm:$0xf]
        %v1237 = vld [vmem:[%s9 + $0x24] sm:$0xf]
        %v1238 = vld [vmem:[%s9 + $0x28] sm:$0xf]
        %v1239 = vld [vmem:[%s9 + $0x2c] sm:$0xf]
        %v1240 = vld [vmem:[%s9 + $0x30] sm:$0xf]
        %v1241 = vld [vmem:[%s9 + $0x34] sm:$0xf]
        %v1242 = vld [vmem:[%s9 + $0x38] sm:$0xf]
        %v1243 = vld [vmem:[%s9 + $0x3c] sm:$0xf]
        %v1244 = vld [vmem:[%s10] sm:$0x1]
        %v1246 = vlaneseq
        %v1247 = vshrl.u32 %v1246, 7
        %v1248 = vsub.s32 0, %v1247
        %v1249 = vrot.slane %v1244, %v1248
        %v1267 = vunpack.c.l.b16 %v1228
        %v1268 = vunpack.c.l.b16 %v1229
        %v1269 = vunpack.c.l.b16 %v1230
        %v1270 = vunpack.c.l.b16 %v1231
        %v1271 = vunpack.c.l.b16 %v1232
        %v1272 = vunpack.c.l.b16 %v1233
        %v1273 = vunpack.c.l.b16 %v1234
        %v1274 = vunpack.c.l.b16 %v1235
        %v1275 = vunpack.c.l.b16 %v1236
        %v1276 = vunpack.c.l.b16 %v1237
        %v1277 = vunpack.c.l.b16 %v1238
        %v1278 = vunpack.c.l.b16 %v1239
        %v1279 = vunpack.c.l.b16 %v1240
        %v1280 = vunpack.c.l.b16 %v1241
        %v1281 = vunpack.c.l.b16 %v1242
        %v1282 = vunpack.c.l.b16 %v1243
        %v1283 = vpack.c.b16 %v1268, %v1267
        %v1284 = vpack.c.b16 %v1270, %v1269
        %v1285 = vpack.c.b16 %v1272, %v1271
        %v1286 = vpack.c.b16 %v1274, %v1273
        %v1287 = vpack.c.b16 %v1276, %v1275
        %v1288 = vpack.c.b16 %v1278, %v1277
        %v1289 = vpack.c.b16 %v1280, %v1279
        %v1290 = vpack.c.b16 %v1282, %v1281
        %1299 = vmatprep.subr.bf16.mxu0 0
        %1300 = vmatpush1.bf16.msra.mxu0 %v1283
        %1301 = vmatprep.subr.bf16.mxu0 0
        %1302 = vmatpush1.bf16.msra.mxu0 %v1284
        %1303 = vmatprep.subr.bf16.mxu0 0
        %1304 = vmatpush1.bf16.msra.mxu0 %v1285
        %1305 = vmatprep.subr.bf16.mxu0 0
        %1306 = vmatpush1.bf16.msra.mxu0 %v1286
        %1307 = vmatprep.subr.bf16.mxu0 0
        %1308 = vmatpush1.bf16.msra.mxu0 %v1287
        %1309 = vmatprep.subr.bf16.mxu0 0
        %1310 = vmatpush1.bf16.msra.mxu0 %v1288
        %1311 = vmatprep.subr.bf16.mxu0 0
        %1312 = vmatpush1.bf16.msra.mxu0 %v1289
        %1313 = vmatprep.subr.bf16.mxu0 0
        %1314 = vmatpush1.bf16.msra.mxu0 %v1290
        %1315 = vmatprep.subr.bf16.mxu0 0
        %1316 = vmatpush1.bf16.msra.mxu0 0
        %1317 = vmatprep.subr.bf16.mxu0 0
        %1318 = vmatpush1.bf16.msra.mxu0 0
        %1319 = vmatprep.subr.bf16.mxu0 0
        %1320 = vmatpush1.bf16.msra.mxu0 0
        %1321 = vmatprep.subr.bf16.mxu0 0
        %1322 = vmatpush1.bf16.msra.mxu0 0
        %1323 = vmatprep.subr.bf16.mxu0 0
        %1324 = vmatpush1.bf16.msra.mxu0 0
        %1325 = vmatprep.subr.bf16.mxu0 0
        %1326 = vmatpush1.bf16.msra.mxu0 0
        %1327 = vmatprep.subr.bf16.mxu0 0
        %1328 = vmatpush1.bf16.msra.mxu0 0
        %1329 = vmatprep.subr.bf16.mxu0 0
        %1330 = vmatpush1.bf16.msra.mxu0 0
        %1331 = vmatprep.mubr.bf16.mxu0 0
        %1332 = vmatmul.mubr.bf16.gmra.mrb[0].mxu0 %v1220
        %v1333 = vpop.f32.mrb[0].mxu0
        %v1334 = vadd.f32 %v1249, %v1333
        %v1335 = vpop.f32.mrb[0].mxu0
        %v1336 = vpop.f32.mrb[0].mxu0
        %v1337 = vadd.f32 %v1249, %v1336
        %v1338 = vpop.f32.mrb[0].mxu0
        %1339 = vmatprep.mubr.bf16.mxu0 0
        %1340 = vmatmul.mubr.bf16.gmra.mrb[0].mxu0 %v1221
        %v1341 = vpop.f32.mrb[0].mxu0
        %v1342 = vadd.f32 %v1249, %v1341
        %v1343 = vpop.f32.mrb[0].mxu0
        %v1344 = vpop.f32.mrb[0].mxu0
        %v1345 = vadd.f32 %v1249, %v1344
        %v1346 = vpop.f32.mrb[0].mxu0
        %1347 = vmatprep.mubr.bf16.mxu0 0
        %1348 = vmatmul.mubr.bf16.gmra.mrb[0].mxu0 %v1222
        %v1349 = vpop.f32.mrb[0].mxu0
        %v1350 = vadd.f32 %v1249, %v1349
        %v1351 = vpop.f32.mrb[0].mxu0
        %v1352 = vpop.f32.mrb[0].mxu0
        %v1353 = vadd.f32 %v1249, %v1352
        %v1354 = vpop.f32.mrb[0].mxu0
        %1355 = vmatprep.mubr.bf16.mxu0 0
        %1356 = vmatmul.mubr.bf16.gmra.mrb[0].mxu0 %v1223
        %v1357 = vpop.f32.mrb[0].mxu0
        %v1358 = vadd.f32 %v1249, %v1357
        %v1359 = vpop.f32.mrb[0].mxu0
        %v1360 = vpop.f32.mrb[0].mxu0
        %v1361 = vadd.f32 %v1249, %v1360
        %v1362 = vpop.f32.mrb[0].mxu0
        %1363 = vmatprep.mubr.bf16.mxu0 0
        %1364 = vmatmul.mubr.bf16.gmra.mrb[0].mxu0 %v1224
        %v1365 = vpop.f32.mrb[0].mxu0
        %v1366 = vadd.f32 %v1249, %v1365
        %v1367 = vpop.f32.mrb[0].mxu0
        %v1368 = vpop.f32.mrb[0].mxu0
        %v1369 = vadd.f32 %v1249, %v1368
        %v1370 = vpop.f32.mrb[0].mxu0
        %1371 = vmatprep.mubr.bf16.mxu0 0
        %1372 = vmatmul.mubr.bf16.gmra.mrb[0].mxu0 %v1225
        %v1373 = vpop.f32.mrb[0].mxu0
        %v1374 = vadd.f32 %v1249, %v1373
        %v1375 = vpop.f32.mrb[0].mxu0
        %v1376 = vpop.f32.mrb[0].mxu0
        %v1377 = vadd.f32 %v1249, %v1376
        %v1378 = vpop.f32.mrb[0].mxu0
        %1379 = vmatprep.mubr.bf16.mxu0 0
        %1380 = vmatmul.mubr.bf16.gmra.mrb[0].mxu0 %v1226
        %v1381 = vpop.f32.mrb[0].mxu0
        %v1382 = vadd.f32 %v1249, %v1381
        %v1383 = vpop.f32.mrb[0].mxu0
        %v1384 = vpop.f32.mrb[0].mxu0
        %v1385 = vadd.f32 %v1249, %v1384
        %v1386 = vpop.f32.mrb[0].mxu0
        %1387 = vmatprep.mubr.bf16.mxu0 0
        %1388 = vmatmul.mubr.bf16.gmra.mrb[0].mxu0 %v1227
        %v1389 = vpop.f32.mrb[0].mxu0
        %v1390 = vadd.f32 %v1249, %v1389
        %v1391 = vpop.f32.mrb[0].mxu0
        %v1392 = vpop.f32.mrb[0].mxu0
        %v1393 = vadd.f32 %v1249, %v1392
        %v1394 = vpop.f32.mrb[0].mxu0
        %1395 = vdwg.mxu0
        %v1396 = vmax.f32 %v1334, 0.0
        %v1397 = vmax.f32 %v1337, 0.0
        %v1398 = vmax.f32 %v1342, 0.0
        %v1399 = vmax.f32 %v1345, 0.0
        %v1400 = vmax.f32 %v1350, 0.0
        %v1401 = vmax.f32 %v1353, 0.0
        %v1402 = vmax.f32 %v1358, 0.0
        %v1403 = vmax.f32 %v1361, 0.0
        %v1404 = vmax.f32 %v1366, 0.0
        %v1405 = vmax.f32 %v1369, 0.0
        %v1406 = vmax.f32 %v1374, 0.0
        %v1407 = vmax.f32 %v1377, 0.0
        %v1408 = vmax.f32 %v1382, 0.0
        %v1409 = vmax.f32 %v1385, 0.0
        %v1410 = vmax.f32 %v1390, 0.0
        %v1411 = vmax.f32 %v1393, 0.0
        %v1412 = vpack.c.bf16 %v1397, %v1396
        %v1413 = vpack.c.bf16 %v1399, %v1398
        %v1414 = vpack.c.bf16 %v1401, %v1400
        %v1415 = vpack.c.bf16 %v1403, %v1402
        %v1416 = vpack.c.bf16 %v1405, %v1404
        %v1417 = vpack.c.bf16 %v1407, %v1406
        %v1418 = vpack.c.bf16 %v1409, %v1408
        %v1419 = vpack.c.bf16 %v1411, %v1410
        %v1420 = vld [vmem:[%s11] sm:$0xf]
        %v1421 = vld [vmem:[%s11 + $0x4] sm:$0xf]
        %v1422 = vld [vmem:[%s11 + $0x8] sm:$0xf]
        %v1423 = vld [vmem:[%s11 + $0xc] sm:$0xf]
        %v1424 = vld [vmem:[%s11 + $0x10] sm:$0xf]
        %v1425 = vld [vmem:[%s11 + $0x14] sm:$0xf]
        %v1426 = vld [vmem:[%s11 + $0x18] sm:$0xf]
        %v1427 = vld [vmem:[%s11 + $0x1c] sm:$0xf]
        %v1428 = vld [vmem:[%s11 + $0x20] sm:$0xf]
        %v1429 = vld [vmem:[%s11 + $0x24] sm:$0xf]
        %v1430 = vld [vmem:[%s11 + $0x28] sm:$0xf]
        %v1431 = vld [vmem:[%s11 + $0x2c] sm:$0xf]
        %v1432 = vld [vmem:[%s11 + $0x30] sm:$0xf]
        %v1433 = vld [vmem:[%s11 + $0x34] sm:$0xf]
        %v1434 = vld [vmem:[%s11 + $0x38] sm:$0xf]
        %v1435 = vld [vmem:[%s11 + $0x3c] sm:$0xf]
        %v1436 = vld [vmem:[%s12] sm:$0x1]
        %v1438 = vlaneseq
        %v1439 = vshrl.u32 %v1438, 7
        %v1440 = vsub.s32 0, %v1439
        %v1441 = vrot.slane %v1436, %v1440
        %v1459 = vunpack.c.l.b16 %v1420
        %v1460 = vunpack.c.l.b16 %v1421
        %v1461 = vunpack.c.l.b16 %v1422
        %v1462 = vunpack.c.l.b16 %v1423
        %v1463 = vunpack.c.l.b16 %v1424
        %v1464 = vunpack.c.l.b16 %v1425
        %v1465 = vunpack.c.l.b16 %v1426
        %v1466 = vunpack.c.l.b16 %v1427
        %v1467 = vunpack.c.l.b16 %v1428
        %v1468 = vunpack.c.l.b16 %v1429
        %v1469 = vunpack.c.l.b16 %v1430
        %v1470 = vunpack.c.l.b16 %v1431
        %v1471 = vunpack.c.l.b16 %v1432
        %v1472 = vunpack.c.l.b16 %v1433
        %v1473 = vunpack.c.l.b16 %v1434
        %v1474 = vunpack.c.l.b16 %v1435
        %v1475 = vpack.c.b16 %v1460, %v1459
        %v1476 = vpack.c.b16 %v1462, %v1461
        %v1477 = vpack.c.b16 %v1464, %v1463
        %v1478 = vpack.c.b16 %v1466, %v1465
        %v1479 = vpack.c.b16 %v1468, %v1467
        %v1480 = vpack.c.b16 %v1470, %v1469
        %v1481 = vpack.c.b16 %v1472, %v1471
        %v1482 = vpack.c.b16 %v1474, %v1473
        %1491 = vmatprep.subr.bf16.mxu0 0
        %1492 = vmatpush1.bf16.msra.mxu0 %v1475
        %1493 = vmatprep.subr.bf16.mxu0 0
        %1494 = vmatpush1.bf16.msra.mxu0 %v1476
        %1495 = vmatprep.subr.bf16.mxu0 0
        %1496 = vmatpush1.bf16.msra.mxu0 %v1477
        %1497 = vmatprep.subr.bf16.mxu0 0
        %1498 = vmatpush1.bf16.msra.mxu0 %v1478
        %1499 = vmatprep.subr.bf16.mxu0 0
        %1500 = vmatpush1.bf16.msra.mxu0 %v1479
        %1501 = vmatprep.subr.bf16.mxu0 0
        %1502 = vmatpush1.bf16.msra.mxu0 %v1480
        %1503 = vmatprep.subr.bf16.mxu0 0
        %1504 = vmatpush1.bf16.msra.mxu0 %v1481
        %1505 = vmatprep.subr.bf16.mxu0 0
        %1506 = vmatpush1.bf16.msra.mxu0 %v1482
        %1507 = vmatprep.subr.bf16.mxu0 0
        %1508 = vmatpush1.bf16.msra.mxu0 0
        %1509 = vmatprep.subr.bf16.mxu0 0
        %1510 = vmatpush1.bf16.msra.mxu0 0
        %1511 = vmatprep.subr.bf16.mxu0 0
        %1512 = vmatpush1.bf16.msra.mxu0 0
        %1513 = vmatprep.subr.bf16.mxu0 0
        %1514 = vmatpush1.bf16.msra.mxu0 0
        %1515 = vmatprep.subr.bf16.mxu0 0
        %1516 = vmatpush1.bf16.msra.mxu0 0
        %1517 = vmatprep.subr.bf16.mxu0 0
        %1518 = vmatpush1.bf16.msra.mxu0 0
        %1519 = vmatprep.subr.bf16.mxu0 0
        %1520 = vmatpush1.bf16.msra.mxu0 0
        %1521 = vmatprep.subr.bf16.mxu0 0
        %1522 = vmatpush1.bf16.msra.mxu0 0
        %1523 = vmatprep.mubr.bf16.mxu0 0
        %1524 = vmatmul.mubr.bf16.gmra.mrb[0].mxu0 %v1412
        %v1525 = vpop.f32.mrb[0].mxu0
        %v1526 = vadd.f32 %v1441, %v1525
        %v1527 = vpop.f32.mrb[0].mxu0
        %v1528 = vpop.f32.mrb[0].mxu0
        %v1529 = vadd.f32 %v1441, %v1528
        %v1530 = vpop.f32.mrb[0].mxu0
        %1531 = vmatprep.mubr.bf16.mxu0 0
        %1532 = vmatmul.mubr.bf16.gmra.mrb[0].mxu0 %v1413
        %v1533 = vpop.f32.mrb[0].mxu0
        %v1534 = vadd.f32 %v1441, %v1533
        %v1535 = vpop.f32.mrb[0].mxu0
        %v1536 = vpop.f32.mrb[0].mxu0
        %v1537 = vadd.f32 %v1441, %v1536
        %v1538 = vpop.f32.mrb[0].mxu0
        %1539 = vmatprep.mubr.bf16.mxu0 0
        %1540 = vmatmul.mubr.bf16.gmra.mrb[0].mxu0 %v1414
        %v1541 = vpop.f32.mrb[0].mxu0
        %v1542 = vadd.f32 %v1441, %v1541
        %v1543 = vpop.f32.mrb[0].mxu0
        %v1544 = vpop.f32.mrb[0].mxu0
        %v1545 = vadd.f32 %v1441, %v1544
        %v1546 = vpop.f32.mrb[0].mxu0
        %1547 = vmatprep.mubr.bf16.mxu0 0
        %1548 = vmatmul.mubr.bf16.gmra.mrb[0].mxu0 %v1415
        %v1549 = vpop.f32.mrb[0].mxu0
        %v1550 = vadd.f32 %v1441, %v1549
        %v1551 = vpop.f32.mrb[0].mxu0
        %v1552 = vpop.f32.mrb[0].mxu0
        %v1553 = vadd.f32 %v1441, %v1552
        %v1554 = vpop.f32.mrb[0].mxu0
        %1555 = vmatprep.mubr.bf16.mxu0 0
        %1556 = vmatmul.mubr.bf16.gmra.mrb[0].mxu0 %v1416
        %v1557 = vpop.f32.mrb[0].mxu0
        %v1558 = vadd.f32 %v1441, %v1557
        %v1559 = vpop.f32.mrb[0].mxu0
        %v1560 = vpop.f32.mrb[0].mxu0
        %v1561 = vadd.f32 %v1441, %v1560
        %v1562 = vpop.f32.mrb[0].mxu0
        %1563 = vmatprep.mubr.bf16.mxu0 0
        %1564 = vmatmul.mubr.bf16.gmra.mrb[0].mxu0 %v1417
        %v1565 = vpop.f32.mrb[0].mxu0
        %v1566 = vadd.f32 %v1441, %v1565
        %v1567 = vpop.f32.mrb[0].mxu0
        %v1568 = vpop.f32.mrb[0].mxu0
        %v1569 = vadd.f32 %v1441, %v1568
        %v1570 = vpop.f32.mrb[0].mxu0
        %1571 = vmatprep.mubr.bf16.mxu0 0
        %1572 = vmatmul.mubr.bf16.gmra.mrb[0].mxu0 %v1418
        %v1573 = vpop.f32.mrb[0].mxu0
        %v1574 = vadd.f32 %v1441, %v1573
        %v1575 = vpop.f32.mrb[0].mxu0
        %v1576 = vpop.f32.mrb[0].mxu0
        %v1577 = vadd.f32 %v1441, %v1576
        %v1578 = vpop.f32.mrb[0].mxu0
        %1579 = vmatprep.mubr.bf16.mxu0 0
        %1580 = vmatmul.mubr.bf16.gmra.mrb[0].mxu0 %v1419
        %v1581 = vpop.f32.mrb[0].mxu0
        %v1582 = vadd.f32 %v1441, %v1581
        %v1583 = vpop.f32.mrb[0].mxu0
        %v1584 = vpop.f32.mrb[0].mxu0
        %v1585 = vadd.f32 %v1441, %v1584
        %v1586 = vpop.f32.mrb[0].mxu0
        %1587 = vdwg.mxu0
        %v1588 = vpack.c.bf16 %v1529, %v1526
        %v1589 = vpack.c.bf16 %v1537, %v1534
        %v1590 = vpack.c.bf16 %v1545, %v1542
        %v1591 = vpack.c.bf16 %v1553, %v1550
        %v1592 = vpack.c.bf16 %v1561, %v1558
        %v1593 = vpack.c.bf16 %v1569, %v1566
        %v1594 = vpack.c.bf16 %v1577, %v1574
        %v1595 = vpack.c.bf16 %v1585, %v1582
        %v1604 = vunpack.c.l.b16 %v1588
        %v1605 = vunpack.c.h.b16 %v1588
        %v1606 = vunpack.c.l.b16 %v1589
        %v1607 = vunpack.c.h.b16 %v1589
        %v1608 = vunpack.c.l.b16 %v1590
        %v1609 = vunpack.c.h.b16 %v1590
        %v1610 = vunpack.c.l.b16 %v1591
        %v1611 = vunpack.c.h.b16 %v1591
        %v1612 = vunpack.c.l.b16 %v1592
        %v1613 = vunpack.c.h.b16 %v1592
        %v1614 = vunpack.c.l.b16 %v1593
        %v1615 = vunpack.c.h.b16 %v1593
        %v1616 = vunpack.c.l.b16 %v1594
        %v1617 = vunpack.c.h.b16 %v1594
        %v1618 = vunpack.c.l.b16 %v1595
        %v1619 = vunpack.c.h.b16 %v1595
        %v1620 = vpack.c.b16 %v1604, %v1604
        %v1621 = vpack.c.b16 %v1605, %v1605
        %v1622 = vpack.c.b16 %v1606, %v1606
        %v1623 = vpack.c.b16 %v1607, %v1607
        %v1624 = vpack.c.b16 %v1608, %v1608
        %v1625 = vpack.c.b16 %v1609, %v1609
        %v1626 = vpack.c.b16 %v1610, %v1610
        %v1627 = vpack.c.b16 %v1611, %v1611
        %v1628 = vpack.c.b16 %v1612, %v1612
        %v1629 = vpack.c.b16 %v1613, %v1613
        %v1630 = vpack.c.b16 %v1614, %v1614
        %v1631 = vpack.c.b16 %v1615, %v1615
        %v1632 = vpack.c.b16 %v1616, %v1616
        %v1633 = vpack.c.b16 %v1617, %v1617
        %v1634 = vpack.c.b16 %v1618, %v1618
        %v1635 = vpack.c.b16 %v1619, %v1619
        %1652 = vst [vmem:[%s434] sm:$0xf] %v1620
        %1653 = vst [vmem:[%s434 + $0x4] sm:$0xf] %v1621
        %1654 = vst [vmem:[%s434 + $0x8] sm:$0xf] %v1622
        %1655 = vst [vmem:[%s434 + $0xc] sm:$0xf] %v1623
        %1656 = vst [vmem:[%s434 + $0x10] sm:$0xf] %v1624
        %1657 = vst [vmem:[%s434 + $0x14] sm:$0xf] %v1625
        %1658 = vst [vmem:[%s434 + $0x18] sm:$0xf] %v1626
        %1659 = vst [vmem:[%s434 + $0x1c] sm:$0xf] %v1627
        %1660 = vst [vmem:[%s434 + $0x20] sm:$0xf] %v1628
        %1661 = vst [vmem:[%s434 + $0x24] sm:$0xf] %v1629
        %1662 = vst [vmem:[%s434 + $0x28] sm:$0xf] %v1630
        %1663 = vst [vmem:[%s434 + $0x2c] sm:$0xf] %v1631
        %1664 = vst [vmem:[%s434 + $0x30] sm:$0xf] %v1632
        %1665 = vst [vmem:[%s434 + $0x34] sm:$0xf] %v1633
        %1666 = vst [vmem:[%s434 + $0x38] sm:$0xf] %v1634
        %1667 = vst [vmem:[%s434 + $0x3c] sm:$0xf] %v1635
        %s1668 = sand.u32 %s313, 1
        %s1669 = scalar_lea.sflag [#allocation3], %s1668
        %s1670 = sand.u32 %s313, 1
        %s1671 = smul.addr %s1670, 64
        %s1672 = scalar_lea.vmem [#allocation2], %s1671
        // Predicated region
        $region73: #{tpu_custom_call.1} parent=71 // pred_check
          %p1673 = pneg %p323
        $region74: #{tpu_custom_call.1} parent=71 // pred_check_branch
          %1675 = sbr.rel (%p1673) target = $region76
        $region75: #{tpu_custom_call.1} parent=71 // pred_region
          %s1676 = smul.u32 16, %s27
          %s1678 = ssub.s32 1024, 1024
          %1679 = vsyncadd %s1669, %s1678
          %s1680 = smul.addr %s1676, 64
          %s1681 = scalar_lea.hbm %s13, %s1680
          %s1682 = sshll.u32 %s1672, 4
          %s1683 = int_to_ptr.vmem [resolvable:$true] %s1682
          %1688 = dma.vmem_to_hbm [thread:$0]  %s1683, 1024, %s1681, %s1669, 64, 64, 4
        $region76: #{tpu_custom_call.1} parent=71 // pred_fallthru
          _
      $region72: #{tpu_custom_call.1} parent=5 // pred_fallthru
        _
      %p1689 = scmp.le.s32.totalorder 2, %s22
      // Predicated region
      $region77: #{tpu_custom_call.1} parent=5 // pred_check
        %p1690 = pneg %p1689
      $region78: #{tpu_custom_call.1} parent=5 // pred_check_branch
        %1692 = sbr.rel (%p1690) target = $region80
      $region79: #{tpu_custom_call.1} parent=5 // pred_region
        %s1693 = ssub.s32 %s22, 2
        // Predicated region
        $region81: #{tpu_custom_call.1} parent=79 // pred_check
          %p1694 = pneg %p329
        $region82: #{tpu_custom_call.1} parent=79 // pred_check_branch
          %1696 = sbr.rel (%p1694) target = $region84
        $region83: #{tpu_custom_call.1} parent=79 // pred_region
          %s1697 = sand.u32 %s314, 1
          %s1698 = scalar_lea.sflag [#allocation3], %s1697
          %s1699 = sand.u32 %s314, 1
          %s1700 = smul.addr %s1699, 64
          %s1701 = scalar_lea.vmem [#allocation2], %s1700
          %1702 = dma.done %s1698, 1024
        $region84: #{tpu_custom_call.1} parent=79 // pred_fallthru
          _
      $region80: #{tpu_custom_call.1} parent=5 // pred_fallthru
        _
    $region6: #{tpu_custom_call.1} parent=1 // loop_footer
      %s26 = sadd.s32 1, %s22
    $region7: #{tpu_custom_call.1} parent=1 // loop_footer_branch
      %21 = sbr.rel target = $region3
    $region8: #{tpu_custom_call.1} parent=1 // loop_exit
      _
    %1703 = vsyncpa [#allocation3], 1
    %s1704 = scalar_lea.sflag [#allocation3], 1
    %1705 = vsyncpa %s1704, 1

</llo_original>
